<compile_context>
chip_gen: v7x
topology: tpu7x:2x2x1
jax: 0.10.0
libtpu: 0.0.40
codegen_flags: <defaults>
</compile_context>

<pallas_src>
import functools

import jax
import jax.numpy as jnp
from jax.experimental import pallas as pl
from jax.experimental.pallas import tpu as pltpu


_LANE = 128


def _round_up(x, m):
    return ((x + m - 1) // m) * m


@functools.lru_cache(maxsize=1)
def _hw_config():
    """Generation-aware VMEM / tiling budget (v7x has 64 MiB VMEM per core)."""
    phys = 128 * 1024 * 1024
    try:
        info = pltpu.get_tpu_info()
        phys = int(getattr(info, "vmem_capacity_bytes", phys))
    except Exception:
        pass
    if phys <= 64 * 1024 * 1024:                                   # v7x-class
        return {"vmem_limit": 32 * 1024 * 1024, "max_tile_m": 1024}
    return {"vmem_limit": 64 * 1024 * 1024, "max_tile_m": 2048}    # v5e / v6e


def _choose_m_tiling(m, row_bytes, resident_bytes, cfg):
    """Largest multiple-of-256 row tile whose double-buffered set fits VMEM."""
    budget = cfg["vmem_limit"] - 2 * resident_bytes - (4 << 20)    # headroom
    budget = max(budget, 4 << 20)
    fit_rows = budget // (2 * max(row_bytes, 1))                   # 2x: dbl buffer
    tile = min(cfg["max_tile_m"], max(256, (fit_rows // 256) * 256))
    if m <= tile:
        return m, m                              # single full-row block, no pad
    return tile, _round_up(m, tile)


def _resident_spec(shape):
    """BlockSpec for a grid-invariant (resident) operand; single-buffered."""
    index_map = lambda i: (0,) * len(shape)
    try:
        return pl.BlockSpec(shape, index_map, pipeline_mode=pl.Buffered(1))
    except Exception:  # older API without pipeline_mode -- default buffering
        return pl.BlockSpec(shape, index_map)


# ----------------------------------------------------------------------------
# Pallas kernels
# ----------------------------------------------------------------------------
def _matmul_bias_act_kernel(a_ref, w_ref, b_ref, o_ref, *, relu):
    # bf16 x bf16 -> f32 accumulation on the MXU, bias + optional ReLU fused.
    acc = jnp.dot(a_ref[...], w_ref[...], preferred_element_type=jnp.float32)
    acc = acc + b_ref[...]                       # (1, N) broadcasts over rows
    if relu:
        acc = jnp.maximum(acc, 0.0)
    o_ref[...] = acc.astype(o_ref.dtype)


def _mlp_head_kernel(x_ref, w1_ref, b1_ref, w2_ref, b2_ref, o_ref):
    # Fused fc1(+ReLU)+fc2: the 512-wide intermediate stays on-chip.
    h = jnp.dot(x_ref[...], w1_ref[...], preferred_element_type=jnp.float32)
    h = jnp.maximum(h + b1_ref[...], 0.0).astype(w2_ref.dtype)
    q = jnp.dot(h, w2_ref[...], preferred_element_type=jnp.float32)
    o_ref[...] = (q + b2_ref[...]).astype(o_ref.dtype)


# ----------------------------------------------------------------------------
# Pallas wrappers
# ----------------------------------------------------------------------------
def matmul_bias_act(a, w, b, *, relu, out_dtype):
    """a: (M, K); w: (K, N) bf16; b: (1, N) f32 -> (M, N). No channel padding."""
    M, K = a.shape
    Kw, N = w.shape
    assert K == Kw, (K, Kw)
    a = a.astype(jnp.bfloat16)

    cfg = _hw_config()
    row_bytes = 2 * K + 4 * N
    resident_bytes = 2 * K * N + 4 * N
    tile_m, m_pad = _choose_m_tiling(M, row_bytes, resident_bytes, cfg)
    if m_pad != M:
        a = jnp.pad(a, ((0, m_pad - M), (0, 0)))

    out = pl.pallas_call(
        functools.partial(_matmul_bias_act_kernel, relu=relu),
        out_shape=jax.ShapeDtypeStruct((m_pad, N), out_dtype),
        grid=(m_pad // tile_m,),
        in_specs=[
            pl.BlockSpec((tile_m, K), lambda i: (i, 0)),
            _resident_spec((K, N)),
            _resident_spec((1, N)),
        ],
        out_specs=pl.BlockSpec((tile_m, N), lambda i: (i, 0)),
        compiler_params=pltpu.CompilerParams(
            dimension_semantics=("parallel",),
            vmem_limit_bytes=cfg["vmem_limit"],
        ),
    )(a, w, b)
    return out if m_pad == M else out[:M]


def mlp_head(flat, w1, b1, w2, b2):
    """Fused fc1+ReLU+fc2. flat: (B, K1); w1: (K1, 512); w2: (512, NAp)."""
    M, K = flat.shape
    K1, N1 = w1.shape
    _, N2 = w2.shape
    assert K == K1, (K, K1)
    flat = flat.astype(jnp.bfloat16)

    cfg = _hw_config()
    row_bytes = 2 * K1 + 4 * N1 + 4 * N2
    resident_bytes = 2 * (K1 * N1 + N1 * N2) + 4 * (N1 + N2)
    tile_m, m_pad = _choose_m_tiling(M, row_bytes, resident_bytes, cfg)
    if m_pad != M:
        flat = jnp.pad(flat, ((0, m_pad - M), (0, 0)))

    out = pl.pallas_call(
        _mlp_head_kernel,
        out_shape=jax.ShapeDtypeStruct((m_pad, N2), jnp.float32),
        grid=(m_pad // tile_m,),
        in_specs=[
            pl.BlockSpec((tile_m, K1), lambda i: (i, 0)),
            _resident_spec((K1, N1)),
            _resident_spec((1, N1)),
            _resident_spec((N1, N2)),
            _resident_spec((1, N2)),
        ],
        out_specs=pl.BlockSpec((tile_m, N2), lambda i: (i, 0)),
        compiler_params=pltpu.CompilerParams(
            dimension_semantics=("parallel",),
            vmem_limit_bytes=cfg["vmem_limit"],
        ),
    )(flat, w1, b1, w2, b2)
    return out if m_pad == M else out[:M]


# ----------------------------------------------------------------------------
# NHWC patch extraction (pure data movement; stays in plain JAX)
# TODO(synk): implicit im2col inside the matmul kernel to avoid the HBM copy.
# ----------------------------------------------------------------------------
def extract_patches_nhwc(x, ksize, stride):
    """x: (B, H, W, C) -> (B*OH*OW, ksize*ksize*C); feature order (kh, kw, c)."""
    B, H, W, C = x.shape
    OH = (H - ksize) // stride + 1
    OW = (W - ksize) // stride + 1
    cols = []
    for kh in range(ksize):
        for kw in range(ksize):
            sl = jax.lax.slice(
                x,
                (0, kh, kw, 0),
                (B, kh + (OH - 1) * stride + 1, kw + (OW - 1) * stride + 1, C),
                (1, stride, stride, 1),
            )                              # (B, OH, OW, C)
            cols.append(sl)
    patches = jnp.concatenate(cols, axis=-1)
    return patches.reshape(B * OH * OW, ksize * ksize * C), OH, OW


def conv2d_relu(x_nhwc, w_mat, b_row, ksize, stride):
    """x: (B, H, W, C) bf16 NHWC; w_mat: (K, OC) bf16 -> (B, OH, OW, OC) bf16."""
    B = x_nhwc.shape[0]
    patches, OH, OW = extract_patches_nhwc(x_nhwc, ksize, stride)
    y = matmul_bias_act(patches, w_mat, b_row, relu=True, out_dtype=jnp.bfloat16)
    return y.reshape(B, OH, OW, w_mat.shape[1])


# ----------------------------------------------------------------------------
# Parameters (PyTorch layout) and one-time prep
# ----------------------------------------------------------------------------
def init_dqn_params(key, input_shape, n_actions):
    C, H, W = input_shape
    ks = jax.random.split(key, 10)

    def norm(k, shape, scale=0.05):
        return scale * jax.random.normal(k, shape, dtype=jnp.float32)

    oh1, ow1 = (H - 8) // 4 + 1, (W - 8) // 4 + 1
    oh2, ow2 = (oh1 - 4) // 2 + 1, (ow1 - 4) // 2 + 1
    oh3, ow3 = oh2 - 3 + 1, ow2 - 3 + 1
    conv_out = 64 * oh3 * ow3              # same as PyTorch _get_conv_out

    return {
        "conv1_w": norm(ks[0], (32, C, 8, 8)),
        "conv1_b": norm(ks[1], (32,)),
        "conv2_w": norm(ks[2], (64, 32, 4, 4)),
        "conv2_b": norm(ks[3], (64,)),
        "conv3_w": norm(ks[4], (64, 64, 3, 3)),
        "conv3_b": norm(ks[5], (64,)),
        "fc1_w": norm(ks[6], (512, conv_out)),   # PyTorch Linear: (out, in)
        "fc1_b": norm(ks[7], (512,)),
        "fc2_w": norm(ks[8], (n_actions, 512)),
        "fc2_b": norm(ks[9], (n_actions,)),
    }


def _prep_conv(w, b):
    """PyTorch (OC, IC, KH, KW) -> ((KH*KW*IC, OC) bf16, (1, OC) f32).

    Row order (kh, kw, c) matches extract_patches_nhwc feature order.
    No channel padding: real OC / real K (full-dim blocks are legal)."""
    OC, IC, KH, KW = w.shape
    w_mat = jnp.transpose(w, (2, 3, 1, 0)).reshape(KH * KW * IC, OC)
    return w_mat.astype(jnp.bfloat16), b.reshape(1, OC).astype(jnp.float32)


def prepare_params(params, input_shape):
    """One-time weight prep (transpose / permute / bf16-cast); no per-call work."""
    C, H, W = input_shape
    oh1, ow1 = (H - 8) // 4 + 1, (W - 8) // 4 + 1
    oh2, ow2 = (oh1 - 4) // 2 + 1, (ow1 - 4) // 2 + 1
    oh3, ow3 = oh2 - 3 + 1, ow2 - 3 + 1

    w1, b1 = _prep_conv(params["conv1_w"], params["conv1_b"])
    w2, b2 = _prep_conv(params["conv2_w"], params["conv2_b"])
    w3, b3 = _prep_conv(params["conv3_w"], params["conv3_b"])

    # fc1: PyTorch .view(B,-1) flatten order is (C=64, OH3, OW3); our NHWC
    # flatten order is (OH3, OW3, 64).  Permute the columns ONCE here.
    fw = params["fc1_w"].reshape(512, 64, oh3, ow3)
    fw = jnp.transpose(fw, (0, 2, 3, 1)).reshape(512, oh3 * ow3 * 64)
    fc1_w = fw.T.astype(jnp.bfloat16)                         # (K1, 512)
    fc1_b = params["fc1_b"].reshape(1, 512).astype(jnp.float32)

    # fc2 is the final layer; padding its N to a lane multiple is nearly free
    # and keeps the last matmul / store lane-dense.
    n_actions = params["fc2_w"].shape[0]
    nap = _round_up(n_actions, _LANE)
    fc2_w = jnp.zeros((512, nap), jnp.float32).at[:, :n_actions].set(
        params["fc2_w"].T).astype(jnp.bfloat16)
    fc2_b = jnp.zeros((1, nap), jnp.float32).at[0, :n_actions].set(params["fc2_b"])

    return {
        "conv1_w": w1, "conv1_b": b1,
        "conv2_w": w2, "conv2_b": b2,
        "conv3_w": w3, "conv3_b": b3,
        "fc1_w": fc1_w, "fc1_b": fc1_b,
        "fc2_w": fc2_w, "fc2_b": fc2_b,
    }


# ----------------------------------------------------------------------------
# DQN forward
# ----------------------------------------------------------------------------
def dqn_forward(prepped, x, *, n_actions):
    """x: (B, C, H, W) NCHW f32 (PyTorch layout). Returns (B, n_actions) f32."""
    x = jnp.transpose(x, (0, 2, 3, 1)).astype(jnp.bfloat16)   # NCHW -> NHWC, bf16
    h = conv2d_relu(x, prepped["conv1_w"], prepped["conv1_b"], ksize=8, stride=4)
    h = conv2d_relu(h, prepped["conv2_w"], prepped["conv2_b"], ksize=4, stride=2)
    h = conv2d_relu(h, prepped["conv3_w"], prepped["conv3_b"], ksize=3, stride=1)
    B = h.shape[0]
    flat = h.reshape(B, -1)                 # (B, OH3*OW3*64), real channels only
    q = mlp_head(flat, prepped["fc1_w"], prepped["fc1_b"],
                 prepped["fc2_w"], prepped["fc2_b"])
    return q[:, :n_actions]


if __name__ == "__main__":
    # Small-but-valid Atari-like shapes: 4 stacked frames of 44x44, batch=2.
    # Conv chain: 44 -> 10 -> 4 -> 2, so conv_out_size = 64*2*2 = 256.
    B, C, H, W = 2, 4, 44, 44
    n_actions = 6

    key = jax.random.PRNGKey(0)
    k_params, k_x = jax.random.split(key)
    params = init_dqn_params(k_params, (C, H, W), n_actions)
    prepped = prepare_params(params, (C, H, W))        # one-time weight prep
    x = jax.random.normal(k_x, (B, C, H, W), dtype=jnp.float32)

    fwd = jax.jit(functools.partial(dqn_forward, n_actions=n_actions))
    q = jax.block_until_ready(fwd(prepped, x))
    assert q.shape == (B, n_actions), q.shape
    assert bool(jnp.all(jnp.isfinite(q)))
    print("KERNEL_OK")
</pallas_src>

<mosaic_0001>
module attributes {stable_mosaic.version = 11 : i64} {
  func.func @_matmul_bias_act_kernel(%arg0: i32, %arg1: memref<200x256xbf16, #tpu.memory_space<vmem>>, %arg2: memref<256x32xbf16, #tpu.memory_space<vmem>>, %arg3: memref<1x32xf32, #tpu.memory_space<vmem>>, %arg4: memref<200x32xbf16, #tpu.memory_space<vmem>>) attributes {dimension_semantics = [#tpu.dimension_semantics<parallel>], iteration_bounds = array<i64: 1>, scalar_prefetch = 0 : i64, scratch_operands = 0 : i64, tpu.core_type = #tpu.core_type<tc>, window_params = [{transform_indices = @transform_0, window_bounds = array<i64: 200, 256>}, {pipeline_mode = #tpu.pipeline_mode<synchronous>, transform_indices = @transform_1, window_bounds = array<i64: 256, 32>}, {pipeline_mode = #tpu.pipeline_mode<synchronous>, transform_indices = @transform_2, window_bounds = array<i64: 1, 32>}, {transform_indices = @transform_3, window_bounds = array<i64: 200, 32>}]} {
    %c0 = arith.constant 0 : index
    %c0_0 = arith.constant 0 : index
    %0 = vector.load %arg1[%c0, %c0_0] : memref<200x256xbf16, #tpu.memory_space<vmem>>, vector<200x256xbf16>
    %c0_1 = arith.constant 0 : index
    %c0_2 = arith.constant 0 : index
    %1 = vector.load %arg2[%c0_1, %c0_2] : memref<256x32xbf16, #tpu.memory_space<vmem>>, vector<256x32xbf16>
    %cst = arith.constant dense<0.000000e+00> : vector<200x32xf32>
    %2 = tpu.matmul %0, %1, %cst {dimension_numbers = #tpu.dot_dimension_numbers<[1], [0], [0], [1], [0, 0, 1, 1], [], []>} : vector<200x256xbf16>, vector<256x32xbf16>, vector<200x32xf32> -> vector<200x32xf32>
    %c0_3 = arith.constant 0 : index
    %c0_4 = arith.constant 0 : index
    %3 = vector.load %arg3[%c0_3, %c0_4] : memref<1x32xf32, #tpu.memory_space<vmem>>, vector<1x32xf32>
    %4 = vector.broadcast %3 : vector<1x32xf32> to vector<200x32xf32>
    %5 = arith.addf %2, %4 : vector<200x32xf32>
    %cst_5 = arith.constant 0.000000e+00 : f32
    %6 = vector.broadcast %cst_5 : f32 to vector<200x32xf32>
    %7 = arith.maximumf %5, %6 : vector<200x32xf32>
    %8 = arith.truncf %7 : vector<200x32xf32> to vector<200x32xbf16>
    %c0_6 = arith.constant 0 : index
    %c0_7 = arith.constant 0 : index
    %9 = vector.load %arg4[%c0_6, %c0_7] : memref<200x32xbf16, #tpu.memory_space<vmem>>, vector<200x32xbf16>
    tpu.vector_store %arg4[%c0_6, %c0_7], %8 {strides = array<i32>} : memref<200x32xbf16, #tpu.memory_space<vmem>>, vector<200x32xbf16>,
    return
  }
  func.func @transform_0(%arg0: i32) -> (i32, i32) {
    %c0_i32 = arith.constant 0 : i32
    %c0_i32_0 = arith.constant 0 : i32
    return %arg0, %c0_i32 : i32, i32
  }
  func.func @transform_1(%arg0: i32) -> (i32, i32) {
    %c0_i32 = arith.constant 0 : i32
    %c0_i32_0 = arith.constant 0 : i32
    %c0_i32_1 = arith.constant 0 : i32
    return %c0_i32, %c0_i32_0 : i32, i32
  }
  func.func @transform_2(%arg0: i32) -> (i32, i32) {
    %c0_i32 = arith.constant 0 : i32
    %c0_i32_0 = arith.constant 0 : i32
    %c0_i32_1 = arith.constant 0 : i32
    return %c0_i32, %c0_i32_0 : i32, i32
  }
  func.func @transform_3(%arg0: i32) -> (i32, i32) {
    %c0_i32 = arith.constant 0 : i32
    %c0_i32_0 = arith.constant 0 : i32
    return %arg0, %c0_i32 : i32, i32
  }
}

module attributes {stable_mosaic.version = 11 : i64} {
  func.func @_matmul_bias_act_kernel(%arg0: i32, %arg1: memref<32x512xbf16, #tpu.memory_space<vmem>>, %arg2: memref<512x64xbf16, #tpu.memory_space<vmem>>, %arg3: memref<1x64xf32, #tpu.memory_space<vmem>>, %arg4: memref<32x64xbf16, #tpu.memory_space<vmem>>) attributes {dimension_semantics = [#tpu.dimension_semantics<parallel>], iteration_bounds = array<i64: 1>, scalar_prefetch = 0 : i64, scratch_operands = 0 : i64, tpu.core_type = #tpu.core_type<tc>, window_params = [{transform_indices = @transform_0, window_bounds = array<i64: 32, 512>}, {pipeline_mode = #tpu.pipeline_mode<synchronous>, transform_indices = @transform_1, window_bounds = array<i64: 512, 64>}, {pipeline_mode = #tpu.pipeline_mode<synchronous>, transform_indices = @transform_2, window_bounds = array<i64: 1, 64>}, {transform_indices = @transform_3, window_bounds = array<i64: 32, 64>}]} {
    %c0 = arith.constant 0 : index
    %c0_0 = arith.constant 0 : index
    %0 = vector.load %arg1[%c0, %c0_0] : memref<32x512xbf16, #tpu.memory_space<vmem>>, vector<32x512xbf16>
    %c0_1 = arith.constant 0 : index
    %c0_2 = arith.constant 0 : index
    %1 = vector.load %arg2[%c0_1, %c0_2] : memref<512x64xbf16, #tpu.memory_space<vmem>>, vector<512x64xbf16>
    %cst = arith.constant dense<0.000000e+00> : vector<32x64xf32>
    %2 = tpu.matmul %0, %1, %cst {dimension_numbers = #tpu.dot_dimension_numbers<[1], [0], [0], [1], [0, 0, 1, 1], [], []>} : vector<32x512xbf16>, vector<512x64xbf16>, vector<32x64xf32> -> vector<32x64xf32>
    %c0_3 = arith.constant 0 : index
    %c0_4 = arith.constant 0 : index
    %3 = vector.load %arg3[%c0_3, %c0_4] : memref<1x64xf32, #tpu.memory_space<vmem>>, vector<1x64xf32>
    %4 = vector.broadcast %3 : vector<1x64xf32> to vector<32x64xf32>
    %5 = arith.addf %2, %4 : vector<32x64xf32>
    %cst_5 = arith.constant 0.000000e+00 : f32
    %6 = vector.broadcast %cst_5 : f32 to vector<32x64xf32>
    %7 = arith.maximumf %5, %6 : vector<32x64xf32>
    %8 = arith.truncf %7 : vector<32x64xf32> to vector<32x64xbf16>
    %c0_6 = arith.constant 0 : index
    %c0_7 = arith.constant 0 : index
    %9 = vector.load %arg4[%c0_6, %c0_7] : memref<32x64xbf16, #tpu.memory_space<vmem>>, vector<32x64xbf16>
    tpu.vector_store %arg4[%c0_6, %c0_7], %8 {strides = array<i32>} : memref<32x64xbf16, #tpu.memory_space<vmem>>, vector<32x64xbf16>,
    return
  }
  func.func @transform_0(%arg0: i32) -> (i32, i32) {
    %c0_i32 = arith.constant 0 : i32
    %c0_i32_0 = arith.constant 0 : i32
    return %arg0, %c0_i32 : i32, i32
  }
  func.func @transform_1(%arg0: i32) -> (i32, i32) {
    %c0_i32 = arith.constant 0 : i32
    %c0_i32_0 = arith.constant 0 : i32
    %c0_i32_1 = arith.constant 0 : i32
    return %c0_i32, %c0_i32_0 : i32, i32
  }
  func.func @transform_2(%arg0: i32) -> (i32, i32) {
    %c0_i32 = arith.constant 0 : i32
    %c0_i32_0 = arith.constant 0 : i32
    %c0_i32_1 = arith.constant 0 : i32
    return %c0_i32, %c0_i32_0 : i32, i32
  }
  func.func @transform_3(%arg0: i32) -> (i32, i32) {
    %c0_i32 = arith.constant 0 : i32
    %c0_i32_0 = arith.constant 0 : i32
    return %arg0, %c0_i32 : i32, i32
  }
}

module attributes {stable_mosaic.version = 11 : i64} {
  func.func @_matmul_bias_act_kernel(%arg0: i32, %arg1: memref<8x576xbf16, #tpu.memory_space<vmem>>, %arg2: memref<576x64xbf16, #tpu.memory_space<vmem>>, %arg3: memref<1x64xf32, #tpu.memory_space<vmem>>, %arg4: memref<8x64xbf16, #tpu.memory_space<vmem>>) attributes {dimension_semantics = [#tpu.dimension_semantics<parallel>], iteration_bounds = array<i64: 1>, scalar_prefetch = 0 : i64, scratch_operands = 0 : i64, tpu.core_type = #tpu.core_type<tc>, window_params = [{transform_indices = @transform_0, window_bounds = array<i64: 8, 576>}, {pipeline_mode = #tpu.pipeline_mode<synchronous>, transform_indices = @transform_1, window_bounds = array<i64: 576, 64>}, {pipeline_mode = #tpu.pipeline_mode<synchronous>, transform_indices = @transform_2, window_bounds = array<i64: 1, 64>}, {transform_indices = @transform_3, window_bounds = array<i64: 8, 64>}]} {
    %c0 = arith.constant 0 : index
    %c0_0 = arith.constant 0 : index
    %0 = vector.load %arg1[%c0, %c0_0] : memref<8x576xbf16, #tpu.memory_space<vmem>>, vector<8x576xbf16>
    %c0_1 = arith.constant 0 : index
    %c0_2 = arith.constant 0 : index
    %1 = vector.load %arg2[%c0_1, %c0_2] : memref<576x64xbf16, #tpu.memory_space<vmem>>, vector<576x64xbf16>
    %cst = arith.constant dense<0.000000e+00> : vector<8x64xf32>
    %2 = tpu.matmul %0, %1, %cst {dimension_numbers = #tpu.dot_dimension_numbers<[1], [0], [0], [1], [0, 0, 1, 1], [], []>} : vector<8x576xbf16>, vector<576x64xbf16>, vector<8x64xf32> -> vector<8x64xf32>
    %c0_3 = arith.constant 0 : index
    %c0_4 = arith.constant 0 : index
    %3 = vector.load %arg3[%c0_3, %c0_4] : memref<1x64xf32, #tpu.memory_space<vmem>>, vector<1x64xf32>
    %4 = vector.broadcast %3 : vector<1x64xf32> to vector<8x64xf32>
    %5 = arith.addf %2, %4 : vector<8x64xf32>
    %cst_5 = arith.constant 0.000000e+00 : f32
    %6 = vector.broadcast %cst_5 : f32 to vector<8x64xf32>
    %7 = arith.maximumf %5, %6 : vector<8x64xf32>
    %8 = arith.truncf %7 : vector<8x64xf32> to vector<8x64xbf16>
    %c0_6 = arith.constant 0 : index
    %c0_7 = arith.constant 0 : index
    %9 = vector.load %arg4[%c0_6, %c0_7] : memref<8x64xbf16, #tpu.memory_space<vmem>>, vector<8x64xbf16>
    tpu.vector_store %arg4[%c0_6, %c0_7], %8 {strides = array<i32>} : memref<8x64xbf16, #tpu.memory_space<vmem>>, vector<8x64xbf16>,
    return
  }
  func.func @transform_0(%arg0: i32) -> (i32, i32) {
    %c0_i32 = arith.constant 0 : i32
    %c0_i32_0 = arith.constant 0 : i32
    return %arg0, %c0_i32 : i32, i32
  }
  func.func @transform_1(%arg0: i32) -> (i32, i32) {
    %c0_i32 = arith.constant 0 : i32
    %c0_i32_0 = arith.constant 0 : i32
    %c0_i32_1 = arith.constant 0 : i32
    return %c0_i32, %c0_i32_0 : i32, i32
  }
  func.func @transform_2(%arg0: i32) -> (i32, i32) {
    %c0_i32 = arith.constant 0 : i32
    %c0_i32_0 = arith.constant 0 : i32
    %c0_i32_1 = arith.constant 0 : i32
    return %c0_i32, %c0_i32_0 : i32, i32
  }
  func.func @transform_3(%arg0: i32) -> (i32, i32) {
    %c0_i32 = arith.constant 0 : i32
    %c0_i32_0 = arith.constant 0 : i32
    return %arg0, %c0_i32 : i32, i32
  }
}

module attributes {stable_mosaic.version = 11 : i64} {
  func.func @_mlp_head_kernel(%arg0: i32, %arg1: memref<2x256xbf16, #tpu.memory_space<vmem>>, %arg2: memref<256x512xbf16, #tpu.memory_space<vmem>>, %arg3: memref<1x512xf32, #tpu.memory_space<vmem>>, %arg4: memref<512x128xbf16, #tpu.memory_space<vmem>>, %arg5: memref<1x128xf32, #tpu.memory_space<vmem>>, %arg6: memref<2x128xf32, #tpu.memory_space<vmem>>) attributes {dimension_semantics = [#tpu.dimension_semantics<parallel>], iteration_bounds = array<i64: 1>, scalar_prefetch = 0 : i64, scratch_operands = 0 : i64, tpu.core_type = #tpu.core_type<tc>, window_params = [{transform_indices = @transform_0, window_bounds = array<i64: 2, 256>}, {pipeline_mode = #tpu.pipeline_mode<synchronous>, transform_indices = @transform_1, window_bounds = array<i64: 256, 512>}, {pipeline_mode = #tpu.pipeline_mode<synchronous>, transform_indices = @transform_2, window_bounds = array<i64: 1, 512>}, {pipeline_mode = #tpu.pipeline_mode<synchronous>, transform_indices = @transform_3, window_bounds = array<i64: 512, 128>}, {pipeline_mode = #tpu.pipeline_mode<synchronous>, transform_indices = @transform_4, window_bounds = array<i64: 1, 128>}, {transform_indices = @transform_5, window_bounds = array<i64: 2, 128>}]} {
    %c0 = arith.constant 0 : index
    %c0_0 = arith.constant 0 : index
    %0 = vector.load %arg1[%c0, %c0_0] : memref<2x256xbf16, #tpu.memory_space<vmem>>, vector<2x256xbf16>
    %c0_1 = arith.constant 0 : index
    %c0_2 = arith.constant 0 : index
    %1 = vector.load %arg2[%c0_1, %c0_2] : memref<256x512xbf16, #tpu.memory_space<vmem>>, vector<256x512xbf16>
    %cst = arith.constant dense<0.000000e+00> : vector<2x512xf32>
    %2 = tpu.matmul %0, %1, %cst {dimension_numbers = #tpu.dot_dimension_numbers<[1], [0], [0], [1], [0, 0, 1, 1], [], []>} : vector<2x256xbf16>, vector<256x512xbf16>, vector<2x512xf32> -> vector<2x512xf32>
    %c0_3 = arith.constant 0 : index
    %c0_4 = arith.constant 0 : index
    %3 = vector.load %arg3[%c0_3, %c0_4] : memref<1x512xf32, #tpu.memory_space<vmem>>, vector<1x512xf32>
    %4 = vector.broadcast %3 : vector<1x512xf32> to vector<2x512xf32>
    %5 = arith.addf %2, %4 : vector<2x512xf32>
    %cst_5 = arith.constant 0.000000e+00 : f32
    %6 = vector.broadcast %cst_5 : f32 to vector<2x512xf32>
    %7 = arith.maximumf %5, %6 : vector<2x512xf32>
    %8 = arith.truncf %7 : vector<2x512xf32> to vector<2x512xbf16>
    %c0_6 = arith.constant 0 : index
    %c0_7 = arith.constant 0 : index
    %9 = vector.load %arg4[%c0_6, %c0_7] : memref<512x128xbf16, #tpu.memory_space<vmem>>, vector<512x128xbf16>
    %cst_8 = arith.constant dense<0.000000e+00> : vector<2x128xf32>
    %10 = tpu.matmul %8, %9, %cst_8 {dimension_numbers = #tpu.dot_dimension_numbers<[1], [0], [0], [1], [0, 0, 1, 1], [], []>} : vector<2x512xbf16>, vector<512x128xbf16>, vector<2x128xf32> -> vector<2x128xf32>
    %c0_9 = arith.constant 0 : index
    %c0_10 = arith.constant 0 : index
    %11 = vector.load %arg5[%c0_9, %c0_10] : memref<1x128xf32, #tpu.memory_space<vmem>>, vector<1x128xf32>
    %12 = vector.broadcast %11 : vector<1x128xf32> to vector<2x128xf32>
    %13 = arith.addf %10, %12 : vector<2x128xf32>
    %c0_11 = arith.constant 0 : index
    %c0_12 = arith.constant 0 : index
    %14 = vector.load %arg6[%c0_11, %c0_12] : memref<2x128xf32, #tpu.memory_space<vmem>>, vector<2x128xf32>
    tpu.vector_store %arg6[%c0_11, %c0_12], %13 {strides = array<i32>} : memref<2x128xf32, #tpu.memory_space<vmem>>, vector<2x128xf32>,
    return
  }
  func.func @transform_0(%arg0: i32) -> (i32, i32) {
    %c0_i32 = arith.constant 0 : i32
    %c0_i32_0 = arith.constant 0 : i32
    return %arg0, %c0_i32 : i32, i32
  }
  func.func @transform_1(%arg0: i32) -> (i32, i32) {
    %c0_i32 = arith.constant 0 : i32
    %c0_i32_0 = arith.constant 0 : i32
    %c0_i32_1 = arith.constant 0 : i32
    return %c0_i32, %c0_i32_0 : i32, i32
  }
  func.func @transform_2(%arg0: i32) -> (i32, i32) {
    %c0_i32 = arith.constant 0 : i32
    %c0_i32_0 = arith.constant 0 : i32
    %c0_i32_1 = arith.constant 0 : i32
    return %c0_i32, %c0_i32_0 : i32, i32
  }
  func.func @transform_3(%arg0: i32) -> (i32, i32) {
    %c0_i32 = arith.constant 0 : i32
    %c0_i32_0 = arith.constant 0 : i32
    %c0_i32_1 = arith.constant 0 : i32
    return %c0_i32, %c0_i32_0 : i32, i32
  }
  func.func @transform_4(%arg0: i32) -> (i32, i32) {
    %c0_i32 = arith.constant 0 : i32
    %c0_i32_0 = arith.constant 0 : i32
    %c0_i32_1 = arith.constant 0 : i32
    return %c0_i32, %c0_i32_0 : i32, i32
  }
  func.func @transform_5(%arg0: i32) -> (i32, i32) {
    %c0_i32 = arith.constant 0 : i32
    %c0_i32_0 = arith.constant 0 : i32
    return %arg0, %c0_i32 : i32, i32
  }
}

</mosaic_0001>

<llo_original>
// kernel: dqn_forward.4
$region0: #{dqn_forward.4}
  #allocation0 [shape = 'u32[]', space=smem, size = 0x4, offset = 0x4, fixed_abs, tag = 'smem constant byte address 0x4 - core index']
  #allocation1 [shape = 'u32[144,128]{1,0:T(1,128)}', space=vmem, size = 0x12000, scoped, tag = 'internal scratch']
  %s0 = inlined_call_operand.hbm [shape: bf16[200,256], index: 0, kind: input, shape index: {}]
  %s1 = inlined_call_operand.hbm [shape: bf16[256,32], index: 1, kind: input, shape index: {}]
  %s2 = inlined_call_operand.hbm [shape: f32[1,32], index: 2, kind: input, shape index: {}]
  %s3 = inlined_call_operand.hbm [shape: bf16[200,32], index: 3, kind: output, shape index: {}]
  %s4 = sld [smem:[#allocation0]]
  $region34: #{dqn_forward.4} parent=0
    _
  %s6 = ssub.s32 1, %s4
  %s7 = scalar_select 0, %s6, %s4
  $region1: #{dqn_forward.4} parent=0
    #allocation2 [shape = 'u8[102400]{0}', space=vmem, size = 0x19000, scoped, tag = 'input window, operand 0, single buffered']
    #allocation3 [shape = 's32[1]{0}', space=sflag, size = 0x4, scoped, tag = 'scoped memory for dqn_forward.4']
    #allocation4 [shape = 's32[1]{0}', space=sflag, size = 0x4, scoped, tag = 'scoped memory for dqn_forward.4']
    #allocation5 [shape = 'u8[65536]{0}', space=vmem, size = 0x10000, scoped, tag = 'input window, operand 1, single buffered']
    #allocation6 [shape = 's32[1]{0}', space=sflag, size = 0x4, scoped, tag = 'scoped memory for dqn_forward.4']
    #allocation7 [shape = 'u8[512]{0}', space=vmem, size = 0x400, scoped, tag = 'input window, operand 2, single buffered']
    #allocation8 [shape = 'u8[51200]{0}', space=vmem, size = 0xc800, scoped, tag = 'output window, operand 0, single buffered']
    %8 = vsyncpa [#allocation3], 0
    %9 = vsyncpa [#allocation6], 0
    %10 = vsyncpa [#allocation4], 0
    // Predicated region
    $region2: #{dqn_forward.4} parent=1 // pred_check
      _
    $region3: #{dqn_forward.4} parent=1 // pred_check_branch
      %12 = sbr.rel (0) target = $region5
    $region4: #{dqn_forward.4} parent=1 // pred_region
      %s14 = ssub.s32 3200, 3200
      %15 = vsyncadd [#allocation3], %s14
      %s16 = sshll.u32 [#allocation2], 4
      %s17 = int_to_ptr.vmem [resolvable:$true] %s16
      %22 = dma.hbm_to_vmem [thread:$0]  %s0, 3200, %s17, [#allocation3], 128, 128, 8
    $region5: #{dqn_forward.4} parent=1 // pred_fallthru
      _
    // Predicated region
    $region6: #{dqn_forward.4} parent=1 // pred_check
      _
    $region7: #{dqn_forward.4} parent=1 // pred_check_branch
      %24 = sbr.rel (0) target = $region9
    $region8: #{dqn_forward.4} parent=1 // pred_region
      %s26 = ssub.s32 2048, 2048
      %27 = vsyncadd [#allocation6], %s26
      %s28 = sshll.u32 [#allocation5], 4
      %s29 = int_to_ptr.vmem [resolvable:$true] %s28
      %34 = dma.hbm_to_vmem [thread:$0]  %s1, 2048, %s29, [#allocation6], 64, 64, 4
    $region9: #{dqn_forward.4} parent=1 // pred_fallthru
      _
    // Predicated region
    $region10: #{dqn_forward.4} parent=1 // pred_check
      _
    $region11: #{dqn_forward.4} parent=1 // pred_check_branch
      %36 = sbr.rel (0) target = $region13
    $region12: #{dqn_forward.4} parent=1 // pred_region
      %s38 = ssub.s32 16, 16
      %39 = vsyncadd [#allocation6], %s38
      %s41 = sshll.u32 [#allocation7], 4
      %s42 = int_to_ptr.vmem [resolvable:$true] %s41
      %44 = dma.hbm_to_vmem [thread:$0]  %s2, 16, %s42, [#allocation6]
    $region13: #{dqn_forward.4} parent=1 // pred_fallthru
      _
    // Predicated region
    $region14: #{dqn_forward.4} parent=1 // pred_check
      _
    $region15: #{dqn_forward.4} parent=1 // pred_check_branch
      %46 = sbr.rel (0) target = $region17
    $region16: #{dqn_forward.4} parent=1 // pred_region
      %47 = dma.done [#allocation3], 3200
    $region17: #{dqn_forward.4} parent=1 // pred_fallthru
      _
    // Predicated region
    $region18: #{dqn_forward.4} parent=1 // pred_check
      _
    $region19: #{dqn_forward.4} parent=1 // pred_check_branch
      %49 = sbr.rel (0) target = $region21
    $region20: #{dqn_forward.4} parent=1 // pred_region
      %50 = dma.done [#allocation6], 2048
    $region21: #{dqn_forward.4} parent=1 // pred_fallthru
      _
    // Predicated region
    $region22: #{dqn_forward.4} parent=1 // pred_check
      _
    $region23: #{dqn_forward.4} parent=1 // pred_check_branch
      %52 = sbr.rel (0) target = $region25
    $region24: #{dqn_forward.4} parent=1 // pred_region
      %53 = dma.done [#allocation6], 16
    $region25: #{dqn_forward.4} parent=1 // pred_fallthru
      _
    %v55 = vld [vmem:[#allocation2] sm:$0xff]
    %v56 = vld [vmem:[#allocation2 + $0x8] sm:$0xff]
    %v57 = vld [vmem:[#allocation2 + $0x10] sm:$0xff]
    %v58 = vld [vmem:[#allocation2 + $0x18] sm:$0xff]
    %v59 = vld [vmem:[#allocation2 + $0x20] sm:$0xff]
    %v60 = vld [vmem:[#allocation2 + $0x28] sm:$0xff]
    %v61 = vld [vmem:[#allocation2 + $0x30] sm:$0xff]
    %v62 = vld [vmem:[#allocation2 + $0x38] sm:$0xff]
    %v63 = vld [vmem:[#allocation2 + $0x40] sm:$0xff]
    %v64 = vld [vmem:[#allocation2 + $0x48] sm:$0xff]
    %v65 = vld [vmem:[#allocation2 + $0x50] sm:$0xff]
    %v66 = vld [vmem:[#allocation2 + $0x58] sm:$0xff]
    %v67 = vld [vmem:[#allocation2 + $0x60] sm:$0xff]
    %v68 = vld [vmem:[#allocation2 + $0x68] sm:$0xff]
    %v69 = vld [vmem:[#allocation2 + $0x70] sm:$0xff]
    %v70 = vld [vmem:[#allocation2 + $0x78] sm:$0xff]
    %v71 = vld [vmem:[#allocation2 + $0x80] sm:$0xff]
    %v72 = vld [vmem:[#allocation2 + $0x88] sm:$0xff]
    %v73 = vld [vmem:[#allocation2 + $0x90] sm:$0xff]
    %v74 = vld [vmem:[#allocation2 + $0x98] sm:$0xff]
    %v75 = vld [vmem:[#allocation2 + $0xa0] sm:$0xff]
    %v76 = vld [vmem:[#allocation2 + $0xa8] sm:$0xff]
    %v77 = vld [vmem:[#allocation2 + $0xb0] sm:$0xff]
    %v78 = vld [vmem:[#allocation2 + $0xb8] sm:$0xff]
    %v79 = vld [vmem:[#allocation2 + $0xc0] sm:$0xff]
    %v80 = vld [vmem:[#allocation5] sm:$0xf]
    %v81 = vld [vmem:[#allocation5 + $0x4] sm:$0xf]
    %v82 = vld [vmem:[#allocation5 + $0x8] sm:$0xf]
    %v83 = vld [vmem:[#allocation5 + $0xc] sm:$0xf]
    %v84 = vld [vmem:[#allocation5 + $0x10] sm:$0xf]
    %v85 = vld [vmem:[#allocation5 + $0x14] sm:$0xf]
    %v86 = vld [vmem:[#allocation5 + $0x18] sm:$0xf]
    %v87 = vld [vmem:[#allocation5 + $0x1c] sm:$0xf]
    %v88 = vld [vmem:[#allocation5 + $0x20] sm:$0xf]
    %v89 = vld [vmem:[#allocation5 + $0x24] sm:$0xf]
    %v90 = vld [vmem:[#allocation5 + $0x28] sm:$0xf]
    %v91 = vld [vmem:[#allocation5 + $0x2c] sm:$0xf]
    %v92 = vld [vmem:[#allocation5 + $0x30] sm:$0xf]
    %v93 = vld [vmem:[#allocation5 + $0x34] sm:$0xf]
    %v94 = vld [vmem:[#allocation5 + $0x38] sm:$0xf]
    %v95 = vld [vmem:[#allocation5 + $0x3c] sm:$0xf]
    %v96 = vld [vmem:[#allocation5 + $0x40] sm:$0xf]
    %v97 = vld [vmem:[#allocation5 + $0x44] sm:$0xf]
    %v98 = vld [vmem:[#allocation5 + $0x48] sm:$0xf]
    %v99 = vld [vmem:[#allocation5 + $0x4c] sm:$0xf]
    %v100 = vld [vmem:[#allocation5 + $0x50] sm:$0xf]
    %v101 = vld [vmem:[#allocation5 + $0x54] sm:$0xf]
    %v102 = vld [vmem:[#allocation5 + $0x58] sm:$0xf]
    %v103 = vld [vmem:[#allocation5 + $0x5c] sm:$0xf]
    %v104 = vld [vmem:[#allocation5 + $0x60] sm:$0xf]
    %v105 = vld [vmem:[#allocation5 + $0x64] sm:$0xf]
    %v106 = vld [vmem:[#allocation5 + $0x68] sm:$0xf]
    %v107 = vld [vmem:[#allocation5 + $0x6c] sm:$0xf]
    %v108 = vld [vmem:[#allocation5 + $0x70] sm:$0xf]
    %v109 = vld [vmem:[#allocation5 + $0x74] sm:$0xf]
    %v110 = vld [vmem:[#allocation5 + $0x78] sm:$0xf]
    %v111 = vld [vmem:[#allocation5 + $0x7c] sm:$0xf]
    %v112 = vld [vmem:[#allocation7] sm:$0x1]
    %v114 = vlaneseq
    %v115 = vshrl.u32 %v114, 7
    %v116 = vsub.s32 0, %v115
    %v117 = vrot.slane %v112, %v116
    %v144 = vunpack.c.l.b16 %v55
    %v145 = vunpack.c.h.b16 %v55
    %v146 = vunpack.c.l.b16 %v56
    %v147 = vunpack.c.h.b16 %v56
    %v148 = vunpack.c.l.b16 %v57
    %v149 = vunpack.c.h.b16 %v57
    %v150 = vunpack.c.l.b16 %v58
    %v151 = vunpack.c.h.b16 %v58
    %v152 = vunpack.c.l.b16 %v59
    %v153 = vunpack.c.h.b16 %v59
    %v154 = vunpack.c.l.b16 %v60
    %v155 = vunpack.c.h.b16 %v60
    %v156 = vunpack.c.l.b16 %v61
    %v157 = vunpack.c.h.b16 %v61
    %v158 = vunpack.c.l.b16 %v62
    %v159 = vunpack.c.h.b16 %v62
    %v160 = vunpack.c.l.b16 %v63
    %v161 = vunpack.c.h.b16 %v63
    %v162 = vunpack.c.l.b16 %v64
    %v163 = vunpack.c.h.b16 %v64
    %v164 = vunpack.c.l.b16 %v65
    %v165 = vunpack.c.h.b16 %v65
    %v166 = vunpack.c.l.b16 %v66
    %v167 = vunpack.c.h.b16 %v66
    %v168 = vunpack.c.l.b16 %v67
    %v169 = vunpack.c.h.b16 %v67
    %v170 = vunpack.c.l.b16 %v68
    %v171 = vunpack.c.h.b16 %v68
    %v172 = vunpack.c.l.b16 %v69
    %v173 = vunpack.c.h.b16 %v69
    %v174 = vunpack.c.l.b16 %v70
    %v175 = vunpack.c.h.b16 %v70
    %v176 = vunpack.c.l.b16 %v71
    %v177 = vunpack.c.h.b16 %v71
    %v178 = vunpack.c.l.b16 %v72
    %v179 = vunpack.c.h.b16 %v72
    %v180 = vunpack.c.l.b16 %v73
    %v181 = vunpack.c.h.b16 %v73
    %v182 = vunpack.c.l.b16 %v74
    %v183 = vunpack.c.h.b16 %v74
    %v184 = vunpack.c.l.b16 %v75
    %v185 = vunpack.c.h.b16 %v75
    %v186 = vunpack.c.l.b16 %v76
    %v187 = vunpack.c.h.b16 %v76
    %v188 = vunpack.c.l.b16 %v77
    %v189 = vunpack.c.h.b16 %v77
    %v190 = vunpack.c.l.b16 %v78
    %v191 = vunpack.c.h.b16 %v78
    %v192 = vunpack.c.l.b16 %v79
    %v193 = vunpack.c.h.b16 %v79
    %v194 = vpack.c.b16 %v146, %v144
    %v195 = vpack.c.b16 %v147, %v145
    %v196 = vpack.c.b16 %v150, %v148
    %v197 = vpack.c.b16 %v151, %v149
    %v198 = vpack.c.b16 %v154, %v152
    %v199 = vpack.c.b16 %v155, %v153
    %v200 = vpack.c.b16 %v158, %v156
    %v201 = vpack.c.b16 %v159, %v157
    %v202 = vpack.c.b16 %v162, %v160
    %v203 = vpack.c.b16 %v163, %v161
    %v204 = vpack.c.b16 %v166, %v164
    %v205 = vpack.c.b16 %v167, %v165
    %v206 = vpack.c.b16 %v170, %v168
    %v207 = vpack.c.b16 %v171, %v169
    %v208 = vpack.c.b16 %v174, %v172
    %v209 = vpack.c.b16 %v175, %v173
    %v210 = vpack.c.b16 %v178, %v176
    %v211 = vpack.c.b16 %v179, %v177
    %v212 = vpack.c.b16 %v182, %v180
    %v213 = vpack.c.b16 %v183, %v181
    %v214 = vpack.c.b16 %v186, %v184
    %v215 = vpack.c.b16 %v187, %v185
    %v216 = vpack.c.b16 %v190, %v188
    %v217 = vpack.c.b16 %v191, %v189
    %v218 = vpack.c.b16 %v192, %v192
    %v219 = vpack.c.b16 %v193, %v193
    %v278 = vunpack.c.l.b16 %v80
    %v279 = vunpack.c.l.b16 %v81
    %v280 = vunpack.c.l.b16 %v82
    %v281 = vunpack.c.l.b16 %v83
    %v282 = vunpack.c.l.b16 %v84
    %v283 = vunpack.c.l.b16 %v85
    %v284 = vunpack.c.l.b16 %v86
    %v285 = vunpack.c.l.b16 %v87
    %v286 = vunpack.c.l.b16 %v88
    %v287 = vunpack.c.l.b16 %v89
    %v288 = vunpack.c.l.b16 %v90
    %v289 = vunpack.c.l.b16 %v91
    %v290 = vunpack.c.l.b16 %v92
    %v291 = vunpack.c.l.b16 %v93
    %v292 = vunpack.c.l.b16 %v94
    %v293 = vunpack.c.l.b16 %v95
    %v294 = vunpack.c.l.b16 %v96
    %v295 = vunpack.c.l.b16 %v97
    %v296 = vunpack.c.l.b16 %v98
    %v297 = vunpack.c.l.b16 %v99
    %v298 = vunpack.c.l.b16 %v100
    %v299 = vunpack.c.l.b16 %v101
    %v300 = vunpack.c.l.b16 %v102
    %v301 = vunpack.c.l.b16 %v103
    %v302 = vunpack.c.l.b16 %v104
    %v303 = vunpack.c.l.b16 %v105
    %v304 = vunpack.c.l.b16 %v106
    %v305 = vunpack.c.l.b16 %v107
    %v306 = vunpack.c.l.b16 %v108
    %v307 = vunpack.c.l.b16 %v109
    %v308 = vunpack.c.l.b16 %v110
    %v309 = vunpack.c.l.b16 %v111
    %v310 = vpack.c.b16 %v279, %v278
    %v311 = vpack.c.b16 %v281, %v280
    %v312 = vpack.c.b16 %v283, %v282
    %v313 = vpack.c.b16 %v285, %v284
    %v314 = vpack.c.b16 %v287, %v286
    %v315 = vpack.c.b16 %v289, %v288
    %v316 = vpack.c.b16 %v291, %v290
    %v317 = vpack.c.b16 %v293, %v292
    %v318 = vpack.c.b16 %v295, %v294
    %v319 = vpack.c.b16 %v297, %v296
    %v320 = vpack.c.b16 %v299, %v298
    %v321 = vpack.c.b16 %v301, %v300
    %v322 = vpack.c.b16 %v303, %v302
    %v323 = vpack.c.b16 %v305, %v304
    %v324 = vpack.c.b16 %v307, %v306
    %v325 = vpack.c.b16 %v309, %v308
    %342 = vmatprep.subr.bf16.mxu0 0
    %343 = vmatpush1.bf16.msra.mxu0 %v310
    %344 = vmatprep.subr.bf16.mxu0 0
    %345 = vmatpush1.bf16.msra.mxu0 %v311
    %346 = vmatprep.subr.bf16.mxu0 0
    %347 = vmatpush1.bf16.msra.mxu0 %v312
    %348 = vmatprep.subr.bf16.mxu0 0
    %349 = vmatpush1.bf16.msra.mxu0 %v313
    %350 = vmatprep.subr.bf16.mxu0 0
    %351 = vmatpush1.bf16.msra.mxu0 %v314
    %352 = vmatprep.subr.bf16.mxu0 0
    %353 = vmatpush1.bf16.msra.mxu0 %v315
    %354 = vmatprep.subr.bf16.mxu0 0
    %355 = vmatpush1.bf16.msra.mxu0 %v316
    %356 = vmatprep.subr.bf16.mxu0 0
    %357 = vmatpush1.bf16.msra.mxu0 %v317
    %358 = vmatprep.subr.bf16.mxu0 0
    %359 = vmatpush1.bf16.msra.mxu0 %v318
    %360 = vmatprep.subr.bf16.mxu0 0
    %361 = vmatpush1.bf16.msra.mxu0 %v319
    %362 = vmatprep.subr.bf16.mxu0 0
    %363 = vmatpush1.bf16.msra.mxu0 %v320
    %364 = vmatprep.subr.bf16.mxu0 0
    %365 = vmatpush1.bf16.msra.mxu0 %v321
    %366 = vmatprep.subr.bf16.mxu0 0
    %367 = vmatpush1.bf16.msra.mxu0 %v322
    %368 = vmatprep.subr.bf16.mxu0 0
    %369 = vmatpush1.bf16.msra.mxu0 %v323
    %370 = vmatprep.subr.bf16.mxu0 0
    %371 = vmatpush1.bf16.msra.mxu0 %v324
    %372 = vmatprep.subr.bf16.mxu0 0
    %373 = vmatpush1.bf16.msra.mxu0 %v325
    %374 = vmatprep.mubr.bf16.mxu0 %v195
    %375 = vmatmul.mubr.bf16.gmra.mrb[0].mxu0 %v194
    %v376 = vpop.f32.mrb[0].mxu0
    %v377 = vadd.f32 %v117, %v376
    %v378 = vpop.f32.mrb[0].mxu0
    %v379 = vpop.f32.mrb[0].mxu0
    %v380 = vadd.f32 %v117, %v379
    %v381 = vpop.f32.mrb[0].mxu0
    %382 = vmatprep.mubr.bf16.mxu0 %v197
    %383 = vmatmul.mubr.bf16.gmra.mrb[0].mxu0 %v196
    %v384 = vpop.f32.mrb[0].mxu0
    %v385 = vadd.f32 %v117, %v384
    %v386 = vpop.f32.mrb[0].mxu0
    %v387 = vpop.f32.mrb[0].mxu0
    %v388 = vadd.f32 %v117, %v387
    %v389 = vpop.f32.mrb[0].mxu0
    %390 = vmatprep.mubr.bf16.mxu0 %v199
    %391 = vmatmul.mubr.bf16.gmra.mrb[0].mxu0 %v198
    %v392 = vpop.f32.mrb[0].mxu0
    %v393 = vadd.f32 %v117, %v392
    %v394 = vpop.f32.mrb[0].mxu0
    %v395 = vpop.f32.mrb[0].mxu0
    %v396 = vadd.f32 %v117, %v395
    %v397 = vpop.f32.mrb[0].mxu0
    %398 = vmatprep.mubr.bf16.mxu0 %v201
    %399 = vmatmul.mubr.bf16.gmra.mrb[0].mxu0 %v200
    %v400 = vpop.f32.mrb[0].mxu0
    %v401 = vadd.f32 %v117, %v400
    %v402 = vpop.f32.mrb[0].mxu0
    %v403 = vpop.f32.mrb[0].mxu0
    %v404 = vadd.f32 %v117, %v403
    %v405 = vpop.f32.mrb[0].mxu0
    %406 = vmatprep.mubr.bf16.mxu0 %v203
    %407 = vmatmul.mubr.bf16.gmra.mrb[0].mxu0 %v202
    %v408 = vpop.f32.mrb[0].mxu0
    %v409 = vadd.f32 %v117, %v408
    %v410 = vpop.f32.mrb[0].mxu0
    %v411 = vpop.f32.mrb[0].mxu0
    %v412 = vadd.f32 %v117, %v411
    %v413 = vpop.f32.mrb[0].mxu0
    %414 = vmatprep.mubr.bf16.mxu0 %v205
    %415 = vmatmul.mubr.bf16.gmra.mrb[0].mxu0 %v204
    %v416 = vpop.f32.mrb[0].mxu0
    %v417 = vadd.f32 %v117, %v416
    %v418 = vpop.f32.mrb[0].mxu0
    %v419 = vpop.f32.mrb[0].mxu0
    %v420 = vadd.f32 %v117, %v419
    %v421 = vpop.f32.mrb[0].mxu0
    %422 = vmatprep.mubr.bf16.mxu0 %v207
    %423 = vmatmul.mubr.bf16.gmra.mrb[0].mxu0 %v206
    %v424 = vpop.f32.mrb[0].mxu0
    %v425 = vadd.f32 %v117, %v424
    %v426 = vpop.f32.mrb[0].mxu0
    %v427 = vpop.f32.mrb[0].mxu0
    %v428 = vadd.f32 %v117, %v427
    %v429 = vpop.f32.mrb[0].mxu0
    %430 = vmatprep.mubr.bf16.mxu0 %v209
    %431 = vmatmul.mubr.bf16.gmra.mrb[0].mxu0 %v208
    %v432 = vpop.f32.mrb[0].mxu0
    %v433 = vadd.f32 %v117, %v432
    %v434 = vpop.f32.mrb[0].mxu0
    %v435 = vpop.f32.mrb[0].mxu0
    %v436 = vadd.f32 %v117, %v435
    %v437 = vpop.f32.mrb[0].mxu0
    %438 = vmatprep.mubr.bf16.mxu0 %v211
    %439 = vmatmul.mubr.bf16.gmra.mrb[0].mxu0 %v210
    %v440 = vpop.f32.mrb[0].mxu0
    %v441 = vadd.f32 %v117, %v440
    %v442 = vpop.f32.mrb[0].mxu0
    %v443 = vpop.f32.mrb[0].mxu0
    %v444 = vadd.f32 %v117, %v443
    %v445 = vpop.f32.mrb[0].mxu0
    %446 = vmatprep.mubr.bf16.mxu0 %v213
    %447 = vmatmul.mubr.bf16.gmra.mrb[0].mxu0 %v212
    %v448 = vpop.f32.mrb[0].mxu0
    %v449 = vadd.f32 %v117, %v448
    %v450 = vpop.f32.mrb[0].mxu0
    %v451 = vpop.f32.mrb[0].mxu0
    %v452 = vadd.f32 %v117, %v451
    %v453 = vpop.f32.mrb[0].mxu0
    %454 = vmatprep.mubr.bf16.mxu0 %v215
    %455 = vmatmul.mubr.bf16.gmra.mrb[0].mxu0 %v214
    %v456 = vpop.f32.mrb[0].mxu0
    %v457 = vadd.f32 %v117, %v456
    %v458 = vpop.f32.mrb[0].mxu0
    %v459 = vpop.f32.mrb[0].mxu0
    %v460 = vadd.f32 %v117, %v459
    %v461 = vpop.f32.mrb[0].mxu0
    %462 = vmatprep.mubr.bf16.mxu0 %v217
    %463 = vmatmul.mubr.bf16.gmra.mrb[0].mxu0 %v216
    %v464 = vpop.f32.mrb[0].mxu0
    %v465 = vadd.f32 %v117, %v464
    %v466 = vpop.f32.mrb[0].mxu0
    %v467 = vpop.f32.mrb[0].mxu0
    %v468 = vadd.f32 %v117, %v467
    %v469 = vpop.f32.mrb[0].mxu0
    %470 = vmatprep.mubr.bf16.mxu0 %v219
    %471 = vmatmul.mubr.bf16.gmra.mrb[0].mxu0 %v218
    %v472 = vpop.f32.mrb[0].mxu0
    %v473 = vadd.f32 %v117, %v472
    %v474 = vpop.f32.mrb[0].mxu0
    %v475 = vpop.f32.mrb[0].mxu0
    %v476 = vpop.f32.mrb[0].mxu0
    %477 = vdwg.mxu0
    %v478 = vmax.f32 %v377, 0.0
    %v479 = vmax.f32 %v380, 0.0
    %v480 = vmax.f32 %v385, 0.0
    %v481 = vmax.f32 %v388, 0.0
    %v482 = vmax.f32 %v393, 0.0
    %v483 = vmax.f32 %v396, 0.0
    %v484 = vmax.f32 %v401, 0.0
    %v485 = vmax.f32 %v404, 0.0
    %v486 = vmax.f32 %v409, 0.0
    %v487 = vmax.f32 %v412, 0.0
    %v488 = vmax.f32 %v417, 0.0
    %v489 = vmax.f32 %v420, 0.0
    %v490 = vmax.f32 %v425, 0.0
    %v491 = vmax.f32 %v428, 0.0
    %v492 = vmax.f32 %v433, 0.0
    %v493 = vmax.f32 %v436, 0.0
    %v494 = vmax.f32 %v441, 0.0
    %v495 = vmax.f32 %v444, 0.0
    %v496 = vmax.f32 %v449, 0.0
    %v497 = vmax.f32 %v452, 0.0
    %v498 = vmax.f32 %v457, 0.0
    %v499 = vmax.f32 %v460, 0.0
    %v500 = vmax.f32 %v465, 0.0
    %v501 = vmax.f32 %v468, 0.0
    %v502 = vmax.f32 %v473, 0.0
    %v503 = vpack.c.bf16 %v479, %v478
    %v504 = vpack.c.bf16 %v481, %v480
    %v505 = vpack.c.bf16 %v483, %v482
    %v506 = vpack.c.bf16 %v485, %v484
    %v507 = vpack.c.bf16 %v487, %v486
    %v508 = vpack.c.bf16 %v489, %v488
    %v509 = vpack.c.bf16 %v491, %v490
    %v510 = vpack.c.bf16 %v493, %v492
    %v511 = vpack.c.bf16 %v495, %v494
    %v512 = vpack.c.bf16 %v497, %v496
    %v513 = vpack.c.bf16 %v499, %v498
    %v514 = vpack.c.bf16 %v501, %v500
    %v515 = vpack.c.bf16 %v502, %v502
    %v529 = vunpack.c.l.b16 %v503
    %v530 = vunpack.c.h.b16 %v503
    %v531 = vunpack.c.l.b16 %v504
    %v532 = vunpack.c.h.b16 %v504
    %v533 = vunpack.c.l.b16 %v505
    %v534 = vunpack.c.h.b16 %v505
    %v535 = vunpack.c.l.b16 %v506
    %v536 = vunpack.c.h.b16 %v506
    %v537 = vunpack.c.l.b16 %v507
    %v538 = vunpack.c.h.b16 %v507
    %v539 = vunpack.c.l.b16 %v508
    %v540 = vunpack.c.h.b16 %v508
    %v541 = vunpack.c.l.b16 %v509
    %v542 = vunpack.c.h.b16 %v509
    %v543 = vunpack.c.l.b16 %v510
    %v544 = vunpack.c.h.b16 %v510
    %v545 = vunpack.c.l.b16 %v511
    %v546 = vunpack.c.h.b16 %v511
    %v547 = vunpack.c.l.b16 %v512
    %v548 = vunpack.c.h.b16 %v512
    %v549 = vunpack.c.l.b16 %v513
    %v550 = vunpack.c.h.b16 %v513
    %v551 = vunpack.c.l.b16 %v514
    %v552 = vunpack.c.h.b16 %v514
    %v553 = vunpack.c.l.b16 %v515
    %v554 = vpack.c.b16 %v529, %v529
    %v555 = vpack.c.b16 %v530, %v530
    %v556 = vpack.c.b16 %v531, %v531
    %v557 = vpack.c.b16 %v532, %v532
    %v558 = vpack.c.b16 %v533, %v533
    %v559 = vpack.c.b16 %v534, %v534
    %v560 = vpack.c.b16 %v535, %v535
    %v561 = vpack.c.b16 %v536, %v536
    %v562 = vpack.c.b16 %v537, %v537
    %v563 = vpack.c.b16 %v538, %v538
    %v564 = vpack.c.b16 %v539, %v539
    %v565 = vpack.c.b16 %v540, %v540
    %v566 = vpack.c.b16 %v541, %v541
    %v567 = vpack.c.b16 %v542, %v542
    %v568 = vpack.c.b16 %v543, %v543
    %v569 = vpack.c.b16 %v544, %v544
    %v570 = vpack.c.b16 %v545, %v545
    %v571 = vpack.c.b16 %v546, %v546
    %v572 = vpack.c.b16 %v547, %v547
    %v573 = vpack.c.b16 %v548, %v548
    %v574 = vpack.c.b16 %v549, %v549
    %v575 = vpack.c.b16 %v550, %v550
    %v576 = vpack.c.b16 %v551, %v551
    %v577 = vpack.c.b16 %v552, %v552
    %v578 = vpack.c.b16 %v553, %v553
    %vm604 = vcmask 257024
    %605 = vst.msk [vmem:[#allocation8] sm:$0xf] %vm604, %v554
    %606 = vst.msk [vmem:[#allocation8 + $0x4] sm:$0xf] %vm604, %v555
    %607 = vst.msk [vmem:[#allocation8 + $0x8] sm:$0xf] %vm604, %v556
    %608 = vst.msk [vmem:[#allocation8 + $0xc] sm:$0xf] %vm604, %v557
    %609 = vst.msk [vmem:[#allocation8 + $0x10] sm:$0xf] %vm604, %v558
    %610 = vst.msk [vmem:[#allocation8 + $0x14] sm:$0xf] %vm604, %v559
    %611 = vst.msk [vmem:[#allocation8 + $0x18] sm:$0xf] %vm604, %v560
    %612 = vst.msk [vmem:[#allocation8 + $0x1c] sm:$0xf] %vm604, %v561
    %613 = vst.msk [vmem:[#allocation8 + $0x20] sm:$0xf] %vm604, %v562
    %614 = vst.msk [vmem:[#allocation8 + $0x24] sm:$0xf] %vm604, %v563
    %615 = vst.msk [vmem:[#allocation8 + $0x28] sm:$0xf] %vm604, %v564
    %616 = vst.msk [vmem:[#allocation8 + $0x2c] sm:$0xf] %vm604, %v565
    %617 = vst.msk [vmem:[#allocation8 + $0x30] sm:$0xf] %vm604, %v566
    %618 = vst.msk [vmem:[#allocation8 + $0x34] sm:$0xf] %vm604, %v567
    %619 = vst.msk [vmem:[#allocation8 + $0x38] sm:$0xf] %vm604, %v568
    %620 = vst.msk [vmem:[#allocation8 + $0x3c] sm:$0xf] %vm604, %v569
    %621 = vst.msk [vmem:[#allocation8 + $0x40] sm:$0xf] %vm604, %v570
    %622 = vst.msk [vmem:[#allocation8 + $0x44] sm:$0xf] %vm604, %v571
    %623 = vst.msk [vmem:[#allocation8 + $0x48] sm:$0xf] %vm604, %v572
    %624 = vst.msk [vmem:[#allocation8 + $0x4c] sm:$0xf] %vm604, %v573
    %625 = vst.msk [vmem:[#allocation8 + $0x50] sm:$0xf] %vm604, %v574
    %626 = vst.msk [vmem:[#allocation8 + $0x54] sm:$0xf] %vm604, %v575
    %627 = vst.msk [vmem:[#allocation8 + $0x58] sm:$0xf] %vm604, %v576
    %628 = vst.msk [vmem:[#allocation8 + $0x5c] sm:$0xf] %vm604, %v577
    %629 = vst.msk [vmem:[#allocation8 + $0x60] sm:$0xf] %vm604, %v578
    // Predicated region
    $region26: #{dqn_forward.4} parent=1 // pred_check
      _
    $region27: #{dqn_forward.4} parent=1 // pred_check_branch
      %631 = sbr.rel (0) target = $region29
    $region28: #{dqn_forward.4} parent=1 // pred_region
      %s633 = ssub.s32 1600, 1600
      %634 = vsyncadd [#allocation4], %s633
      %s635 = sshll.u32 [#allocation8], 4
      %s636 = int_to_ptr.vmem [resolvable:$true] %s635
      %641 = dma.vmem_to_hbm [thread:$0]  %s636, 1600, %s3, [#allocation4], 64, 64, 4
    $region29: #{dqn_forward.4} parent=1 // pred_fallthru
      _
    // Predicated region
    $region30: #{dqn_forward.4} parent=1 // pred_check
      _
    $region31: #{dqn_forward.4} parent=1 // pred_check_branch
      %643 = sbr.rel (0) target = $region33
    $region32: #{dqn_forward.4} parent=1 // pred_region
      %644 = dma.done [#allocation4], 1600
    $region33: #{dqn_forward.4} parent=1 // pred_fallthru
      _
    %645 = vsyncpa [#allocation3], 1
    %646 = vsyncpa [#allocation6], 1
    %647 = vsyncpa [#allocation4], 1

// kernel: dqn_forward.5
$region0: #{dqn_forward.5}
  #allocation0 [shape = 'u32[]', space=smem, size = 0x4, offset = 0x4, fixed_abs, tag = 'smem constant byte address 0x4 - core index']
  #allocation1 [shape = 'u32[144,128]{1,0:T(1,128)}', space=vmem, size = 0x12000, scoped, tag = 'internal scratch']
  %s0 = inlined_call_operand.hbm [shape: bf16[32,512], index: 0, kind: input, shape index: {}]
  %s1 = inlined_call_operand.hbm [shape: bf16[512,64], index: 1, kind: input, shape index: {}]
  %s2 = inlined_call_operand.hbm [shape: f32[1,64], index: 2, kind: input, shape index: {}]
  %s3 = inlined_call_operand.hbm [shape: bf16[32,64], index: 3, kind: output, shape index: {}]
  %s4 = sld [smem:[#allocation0]]
  $region34: #{dqn_forward.5} parent=0
    _
  %s6 = ssub.s32 1, %s4
  %s7 = scalar_select 0, %s6, %s4
  $region1: #{dqn_forward.5} parent=0
    #allocation2 [shape = 'u8[32768]{0}', space=vmem, size = 0x8000, scoped, tag = 'input window, operand 0, single buffered']
    #allocation3 [shape = 's32[1]{0}', space=sflag, size = 0x4, scoped, tag = 'scoped memory for dqn_forward.5']
    #allocation4 [shape = 's32[1]{0}', space=sflag, size = 0x4, scoped, tag = 'scoped memory for dqn_forward.5']
    #allocation5 [shape = 'u8[131072]{0}', space=vmem, size = 0x20000, scoped, tag = 'input window, operand 1, single buffered']
    #allocation6 [shape = 's32[1]{0}', space=sflag, size = 0x4, scoped, tag = 'scoped memory for dqn_forward.5']
    #allocation7 [shape = 'u8[512]{0}', space=vmem, size = 0x400, scoped, tag = 'input window, operand 2, single buffered']
    #allocation8 [shape = 'u8[8192]{0}', space=vmem, size = 0x2000, scoped, tag = 'output window, operand 0, single buffered']
    %8 = vsyncpa [#allocation3], 0
    %9 = vsyncpa [#allocation6], 0
    %10 = vsyncpa [#allocation4], 0
    // Predicated region
    $region2: #{dqn_forward.5} parent=1 // pred_check
      _
    $region3: #{dqn_forward.5} parent=1 // pred_check_branch
      %12 = sbr.rel (0) target = $region5
    $region4: #{dqn_forward.5} parent=1 // pred_region
      %s14 = ssub.s32 1024, 1024
      %15 = vsyncadd [#allocation3], %s14
      %s16 = sshll.u32 [#allocation2], 4
      %s17 = int_to_ptr.vmem [resolvable:$true] %s16
      %22 = dma.hbm_to_vmem [thread:$0]  %s0, 1024, %s17, [#allocation3], 256, 256, 16
    $region5: #{dqn_forward.5} parent=1 // pred_fallthru
      _
    // Predicated region
    $region6: #{dqn_forward.5} parent=1 // pred_check
      _
    $region7: #{dqn_forward.5} parent=1 // pred_check_branch
      %24 = sbr.rel (0) target = $region9
    $region8: #{dqn_forward.5} parent=1 // pred_region
      %s26 = ssub.s32 4096, 4096
      %27 = vsyncadd [#allocation6], %s26
      %s28 = sshll.u32 [#allocation5], 4
      %s29 = int_to_ptr.vmem [resolvable:$true] %s28
      %34 = dma.hbm_to_vmem [thread:$0]  %s1, 4096, %s29, [#allocation6], 64, 64, 4
    $region9: #{dqn_forward.5} parent=1 // pred_fallthru
      _
    // Predicated region
    $region10: #{dqn_forward.5} parent=1 // pred_check
      _
    $region11: #{dqn_forward.5} parent=1 // pred_check_branch
      %36 = sbr.rel (0) target = $region13
    $region12: #{dqn_forward.5} parent=1 // pred_region
      %s38 = ssub.s32 16, 16
      %39 = vsyncadd [#allocation6], %s38
      %s41 = sshll.u32 [#allocation7], 4
      %s42 = int_to_ptr.vmem [resolvable:$true] %s41
      %44 = dma.hbm_to_vmem [thread:$0]  %s2, 16, %s42, [#allocation6]
    $region13: #{dqn_forward.5} parent=1 // pred_fallthru
      _
    // Predicated region
    $region14: #{dqn_forward.5} parent=1 // pred_check
      _
    $region15: #{dqn_forward.5} parent=1 // pred_check_branch
      %46 = sbr.rel (0) target = $region17
    $region16: #{dqn_forward.5} parent=1 // pred_region
      %47 = dma.done [#allocation3], 1024
    $region17: #{dqn_forward.5} parent=1 // pred_fallthru
      _
    // Predicated region
    $region18: #{dqn_forward.5} parent=1 // pred_check
      _
    $region19: #{dqn_forward.5} parent=1 // pred_check_branch
      %49 = sbr.rel (0) target = $region21
    $region20: #{dqn_forward.5} parent=1 // pred_region
      %50 = dma.done [#allocation6], 4096
    $region21: #{dqn_forward.5} parent=1 // pred_fallthru
      _
    // Predicated region
    $region22: #{dqn_forward.5} parent=1 // pred_check
      _
    $region23: #{dqn_forward.5} parent=1 // pred_check_branch
      %52 = sbr.rel (0) target = $region25
    $region24: #{dqn_forward.5} parent=1 // pred_region
      %53 = dma.done [#allocation6], 16
    $region25: #{dqn_forward.5} parent=1 // pred_fallthru
      _
    %v55 = vld [vmem:[#allocation2] sm:$0xff]
    %v56 = vld [vmem:[#allocation2 + $0x8] sm:$0xff]
    %v57 = vld [vmem:[#allocation2 + $0x10] sm:$0xff]
    %v58 = vld [vmem:[#allocation2 + $0x18] sm:$0xff]
    %v59 = vld [vmem:[#allocation2 + $0x20] sm:$0xff]
    %v60 = vld [vmem:[#allocation2 + $0x28] sm:$0xff]
    %v61 = vld [vmem:[#allocation2 + $0x30] sm:$0xff]
    %v62 = vld [vmem:[#allocation2 + $0x38] sm:$0xff]
    %v63 = vld [vmem:[#allocation5] sm:$0xf]
    %v64 = vld [vmem:[#allocation5 + $0x4] sm:$0xf]
    %v65 = vld [vmem:[#allocation5 + $0x8] sm:$0xf]
    %v66 = vld [vmem:[#allocation5 + $0xc] sm:$0xf]
    %v67 = vld [vmem:[#allocation5 + $0x10] sm:$0xf]
    %v68 = vld [vmem:[#allocation5 + $0x14] sm:$0xf]
    %v69 = vld [vmem:[#allocation5 + $0x18] sm:$0xf]
    %v70 = vld [vmem:[#allocation5 + $0x1c] sm:$0xf]
    %v71 = vld [vmem:[#allocation5 + $0x20] sm:$0xf]
    %v72 = vld [vmem:[#allocation5 + $0x24] sm:$0xf]
    %v73 = vld [vmem:[#allocation5 + $0x28] sm:$0xf]
    %v74 = vld [vmem:[#allocation5 + $0x2c] sm:$0xf]
    %v75 = vld [vmem:[#allocation5 + $0x30] sm:$0xf]
    %v76 = vld [vmem:[#allocation5 + $0x34] sm:$0xf]
    %v77 = vld [vmem:[#allocation5 + $0x38] sm:$0xf]
    %v78 = vld [vmem:[#allocation5 + $0x3c] sm:$0xf]
    %v79 = vld [vmem:[#allocation5 + $0x40] sm:$0xf]
    %v80 = vld [vmem:[#allocation5 + $0x44] sm:$0xf]
    %v81 = vld [vmem:[#allocation5 + $0x48] sm:$0xf]
    %v82 = vld [vmem:[#allocation5 + $0x4c] sm:$0xf]
    %v83 = vld [vmem:[#allocation5 + $0x50] sm:$0xf]
    %v84 = vld [vmem:[#allocation5 + $0x54] sm:$0xf]
    %v85 = vld [vmem:[#allocation5 + $0x58] sm:$0xf]
    %v86 = vld [vmem:[#allocation5 + $0x5c] sm:$0xf]
    %v87 = vld [vmem:[#allocation5 + $0x60] sm:$0xf]
    %v88 = vld [vmem:[#allocation5 + $0x64] sm:$0xf]
    %v89 = vld [vmem:[#allocation5 + $0x68] sm:$0xf]
    %v90 = vld [vmem:[#allocation5 + $0x6c] sm:$0xf]
    %v91 = vld [vmem:[#allocation5 + $0x70] sm:$0xf]
    %v92 = vld [vmem:[#allocation5 + $0x74] sm:$0xf]
    %v93 = vld [vmem:[#allocation5 + $0x78] sm:$0xf]
    %v94 = vld [vmem:[#allocation5 + $0x7c] sm:$0xf]
    %v95 = vld [vmem:[#allocation5 + $0x80] sm:$0xf]
    %v96 = vld [vmem:[#allocation5 + $0x84] sm:$0xf]
    %v97 = vld [vmem:[#allocation5 + $0x88] sm:$0xf]
    %v98 = vld [vmem:[#allocation5 + $0x8c] sm:$0xf]
    %v99 = vld [vmem:[#allocation5 + $0x90] sm:$0xf]
    %v100 = vld [vmem:[#allocation5 + $0x94] sm:$0xf]
    %v101 = vld [vmem:[#allocation5 + $0x98] sm:$0xf]
    %v102 = vld [vmem:[#allocation5 + $0x9c] sm:$0xf]
    %v103 = vld [vmem:[#allocation5 + $0xa0] sm:$0xf]
    %v104 = vld [vmem:[#allocation5 + $0xa4] sm:$0xf]
    %v105 = vld [vmem:[#allocation5 + $0xa8] sm:$0xf]
    %v106 = vld [vmem:[#allocation5 + $0xac] sm:$0xf]
    %v107 = vld [vmem:[#allocation5 + $0xb0] sm:$0xf]
    %v108 = vld [vmem:[#allocation5 + $0xb4] sm:$0xf]
    %v109 = vld [vmem:[#allocation5 + $0xb8] sm:$0xf]
    %v110 = vld [vmem:[#allocation5 + $0xbc] sm:$0xf]
    %v111 = vld [vmem:[#allocation5 + $0xc0] sm:$0xf]
    %v112 = vld [vmem:[#allocation5 + $0xc4] sm:$0xf]
    %v113 = vld [vmem:[#allocation5 + $0xc8] sm:$0xf]
    %v114 = vld [vmem:[#allocation5 + $0xcc] sm:$0xf]
    %v115 = vld [vmem:[#allocation5 + $0xd0] sm:$0xf]
    %v116 = vld [vmem:[#allocation5 + $0xd4] sm:$0xf]
    %v117 = vld [vmem:[#allocation5 + $0xd8] sm:$0xf]
    %v118 = vld [vmem:[#allocation5 + $0xdc] sm:$0xf]
    %v119 = vld [vmem:[#allocation5 + $0xe0] sm:$0xf]
    %v120 = vld [vmem:[#allocation5 + $0xe4] sm:$0xf]
    %v121 = vld [vmem:[#allocation5 + $0xe8] sm:$0xf]
    %v122 = vld [vmem:[#allocation5 + $0xec] sm:$0xf]
    %v123 = vld [vmem:[#allocation5 + $0xf0] sm:$0xf]
    %v124 = vld [vmem:[#allocation5 + $0xf4] sm:$0xf]
    %v125 = vld [vmem:[#allocation5 + $0xf8] sm:$0xf]
    %v126 = vld [vmem:[#allocation5 + $0xfc] sm:$0xf]
    %v127 = vld [vmem:[#allocation7] sm:$0x1]
    %v129 = vlaneseq
    %v130 = vshrl.u32 %v129, 7
    %v131 = vsub.s32 0, %v130
    %v132 = vrot.slane %v127, %v131
    %v142 = vunpack.c.l.b16 %v55
    %v143 = vunpack.c.h.b16 %v55
    %v144 = vunpack.c.l.b16 %v56
    %v145 = vunpack.c.h.b16 %v56
    %v146 = vunpack.c.l.b16 %v57
    %v147 = vunpack.c.h.b16 %v57
    %v148 = vunpack.c.l.b16 %v58
    %v149 = vunpack.c.h.b16 %v58
    %v150 = vunpack.c.l.b16 %v59
    %v151 = vunpack.c.h.b16 %v59
    %v152 = vunpack.c.l.b16 %v60
    %v153 = vunpack.c.h.b16 %v60
    %v154 = vunpack.c.l.b16 %v61
    %v155 = vunpack.c.h.b16 %v61
    %v156 = vunpack.c.l.b16 %v62
    %v157 = vunpack.c.h.b16 %v62
    %v158 = vpack.c.b16 %v146, %v142
    %v159 = vpack.c.b16 %v147, %v143
    %v160 = vpack.c.b16 %v148, %v144
    %v161 = vpack.c.b16 %v149, %v145
    %v162 = vpack.c.b16 %v154, %v150
    %v163 = vpack.c.b16 %v155, %v151
    %v164 = vpack.c.b16 %v156, %v152
    %v165 = vpack.c.b16 %v157, %v153
    %v238 = vunpack.c.l.b16 %v63
    %v239 = vunpack.c.l.b16 %v64
    %v240 = vunpack.c.l.b16 %v65
    %v241 = vunpack.c.l.b16 %v66
    %v242 = vunpack.c.l.b16 %v67
    %v243 = vunpack.c.l.b16 %v68
    %v244 = vunpack.c.l.b16 %v69
    %v245 = vunpack.c.l.b16 %v70
    %v246 = vunpack.c.l.b16 %v71
    %v247 = vunpack.c.l.b16 %v72
    %v248 = vunpack.c.l.b16 %v73
    %v249 = vunpack.c.l.b16 %v74
    %v250 = vunpack.c.l.b16 %v75
    %v251 = vunpack.c.l.b16 %v76
    %v252 = vunpack.c.l.b16 %v77
    %v253 = vunpack.c.l.b16 %v78
    %v254 = vunpack.c.l.b16 %v79
    %v255 = vunpack.c.l.b16 %v80
    %v256 = vunpack.c.l.b16 %v81
    %v257 = vunpack.c.l.b16 %v82
    %v258 = vunpack.c.l.b16 %v83
    %v259 = vunpack.c.l.b16 %v84
    %v260 = vunpack.c.l.b16 %v85
    %v261 = vunpack.c.l.b16 %v86
    %v262 = vunpack.c.l.b16 %v87
    %v263 = vunpack.c.l.b16 %v88
    %v264 = vunpack.c.l.b16 %v89
    %v265 = vunpack.c.l.b16 %v90
    %v266 = vunpack.c.l.b16 %v91
    %v267 = vunpack.c.l.b16 %v92
    %v268 = vunpack.c.l.b16 %v93
    %v269 = vunpack.c.l.b16 %v94
    %v270 = vunpack.c.l.b16 %v95
    %v271 = vunpack.c.l.b16 %v96
    %v272 = vunpack.c.l.b16 %v97
    %v273 = vunpack.c.l.b16 %v98
    %v274 = vunpack.c.l.b16 %v99
    %v275 = vunpack.c.l.b16 %v100
    %v276 = vunpack.c.l.b16 %v101
    %v277 = vunpack.c.l.b16 %v102
    %v278 = vunpack.c.l.b16 %v103
    %v279 = vunpack.c.l.b16 %v104
    %v280 = vunpack.c.l.b16 %v105
    %v281 = vunpack.c.l.b16 %v106
    %v282 = vunpack.c.l.b16 %v107
    %v283 = vunpack.c.l.b16 %v108
    %v284 = vunpack.c.l.b16 %v109
    %v285 = vunpack.c.l.b16 %v110
    %v286 = vunpack.c.l.b16 %v111
    %v287 = vunpack.c.l.b16 %v112
    %v288 = vunpack.c.l.b16 %v113
    %v289 = vunpack.c.l.b16 %v114
    %v290 = vunpack.c.l.b16 %v115
    %v291 = vunpack.c.l.b16 %v116
    %v292 = vunpack.c.l.b16 %v117
    %v293 = vunpack.c.l.b16 %v118
    %v294 = vunpack.c.l.b16 %v119
    %v295 = vunpack.c.l.b16 %v120
    %v296 = vunpack.c.l.b16 %v121
    %v297 = vunpack.c.l.b16 %v122
    %v298 = vunpack.c.l.b16 %v123
    %v299 = vunpack.c.l.b16 %v124
    %v300 = vunpack.c.l.b16 %v125
    %v301 = vunpack.c.l.b16 %v126
    %v302 = vpack.c.b16 %v239, %v238
    %v303 = vpack.c.b16 %v241, %v240
    %v304 = vpack.c.b16 %v243, %v242
    %v305 = vpack.c.b16 %v245, %v244
    %v306 = vpack.c.b16 %v247, %v246
    %v307 = vpack.c.b16 %v249, %v248
    %v308 = vpack.c.b16 %v251, %v250
    %v309 = vpack.c.b16 %v253, %v252
    %v310 = vpack.c.b16 %v255, %v254
    %v311 = vpack.c.b16 %v257, %v256
    %v312 = vpack.c.b16 %v259, %v258
    %v313 = vpack.c.b16 %v261, %v260
    %v314 = vpack.c.b16 %v263, %v262
    %v315 = vpack.c.b16 %v265, %v264
    %v316 = vpack.c.b16 %v267, %v266
    %v317 = vpack.c.b16 %v269, %v268
    %v318 = vpack.c.b16 %v271, %v270
    %v319 = vpack.c.b16 %v273, %v272
    %v320 = vpack.c.b16 %v275, %v274
    %v321 = vpack.c.b16 %v277, %v276
    %v322 = vpack.c.b16 %v279, %v278
    %v323 = vpack.c.b16 %v281, %v280
    %v324 = vpack.c.b16 %v283, %v282
    %v325 = vpack.c.b16 %v285, %v284
    %v326 = vpack.c.b16 %v287, %v286
    %v327 = vpack.c.b16 %v289, %v288
    %v328 = vpack.c.b16 %v291, %v290
    %v329 = vpack.c.b16 %v293, %v292
    %v330 = vpack.c.b16 %v295, %v294
    %v331 = vpack.c.b16 %v297, %v296
    %v332 = vpack.c.b16 %v299, %v298
    %v333 = vpack.c.b16 %v301, %v300
    %366 = vmatprep.subr.bf16.mxu0 0
    %367 = vmatpush1.bf16.msra.mxu0 %v302
    %368 = vmatprep.subr.bf16.mxu0 0
    %369 = vmatpush1.bf16.msra.mxu0 %v303
    %370 = vmatprep.subr.bf16.mxu0 0
    %371 = vmatpush1.bf16.msra.mxu0 %v304
    %372 = vmatprep.subr.bf16.mxu0 0
    %373 = vmatpush1.bf16.msra.mxu0 %v305
    %374 = vmatprep.subr.bf16.mxu0 0
    %375 = vmatpush1.bf16.msra.mxu0 %v306
    %376 = vmatprep.subr.bf16.mxu0 0
    %377 = vmatpush1.bf16.msra.mxu0 %v307
    %378 = vmatprep.subr.bf16.mxu0 0
    %379 = vmatpush1.bf16.msra.mxu0 %v308
    %380 = vmatprep.subr.bf16.mxu0 0
    %381 = vmatpush1.bf16.msra.mxu0 %v309
    %382 = vmatprep.subr.bf16.mxu0 0
    %383 = vmatpush1.bf16.msra.mxu0 %v310
    %384 = vmatprep.subr.bf16.mxu0 0
    %385 = vmatpush1.bf16.msra.mxu0 %v311
    %386 = vmatprep.subr.bf16.mxu0 0
    %387 = vmatpush1.bf16.msra.mxu0 %v312
    %388 = vmatprep.subr.bf16.mxu0 0
    %389 = vmatpush1.bf16.msra.mxu0 %v313
    %390 = vmatprep.subr.bf16.mxu0 0
    %391 = vmatpush1.bf16.msra.mxu0 %v314
    %392 = vmatprep.subr.bf16.mxu0 0
    %393 = vmatpush1.bf16.msra.mxu0 %v315
    %394 = vmatprep.subr.bf16.mxu0 0
    %395 = vmatpush1.bf16.msra.mxu0 %v316
    %396 = vmatprep.subr.bf16.mxu0 0
    %397 = vmatpush1.bf16.msra.mxu0 %v317
    %398 = vmatprep.mubr.bf16.mxu0 %v159
    %399 = vmatmul.mubr.bf16.gmra.mrb[0].mxu0 %v158
    %v400 = vpop.f32.mrb[0].mxu0
    %v401 = vadd.f32 %v132, %v400
    %v402 = vpop.f32.mrb[0].mxu0
    %v403 = vpop.f32.mrb[0].mxu0
    %v404 = vadd.f32 %v132, %v403
    %v405 = vpop.f32.mrb[0].mxu0
    %406 = vmatprep.mubr.bf16.mxu0 %v163
    %407 = vmatmul.mubr.bf16.gmra.mrb[0].mxu0 %v162
    %v408 = vpop.f32.mrb[0].mxu0
    %v409 = vadd.f32 %v132, %v408
    %v410 = vpop.f32.mrb[0].mxu0
    %v411 = vpop.f32.mrb[0].mxu0
    %v412 = vadd.f32 %v132, %v411
    %v413 = vpop.f32.mrb[0].mxu0
    %414 = vdwg.mxu0
    %415 = vmatprep.subr.bf16.mxu0 0
    %416 = vmatpush1.bf16.msra.mxu0 %v318
    %417 = vmatprep.subr.bf16.mxu0 0
    %418 = vmatpush1.bf16.msra.mxu0 %v319
    %419 = vmatprep.subr.bf16.mxu0 0
    %420 = vmatpush1.bf16.msra.mxu0 %v320
    %421 = vmatprep.subr.bf16.mxu0 0
    %422 = vmatpush1.bf16.msra.mxu0 %v321
    %423 = vmatprep.subr.bf16.mxu0 0
    %424 = vmatpush1.bf16.msra.mxu0 %v322
    %425 = vmatprep.subr.bf16.mxu0 0
    %426 = vmatpush1.bf16.msra.mxu0 %v323
    %427 = vmatprep.subr.bf16.mxu0 0
    %428 = vmatpush1.bf16.msra.mxu0 %v324
    %429 = vmatprep.subr.bf16.mxu0 0
    %430 = vmatpush1.bf16.msra.mxu0 %v325
    %431 = vmatprep.subr.bf16.mxu0 0
    %432 = vmatpush1.bf16.msra.mxu0 %v326
    %433 = vmatprep.subr.bf16.mxu0 0
    %434 = vmatpush1.bf16.msra.mxu0 %v327
    %435 = vmatprep.subr.bf16.mxu0 0
    %436 = vmatpush1.bf16.msra.mxu0 %v328
    %437 = vmatprep.subr.bf16.mxu0 0
    %438 = vmatpush1.bf16.msra.mxu0 %v329
    %439 = vmatprep.subr.bf16.mxu0 0
    %440 = vmatpush1.bf16.msra.mxu0 %v330
    %441 = vmatprep.subr.bf16.mxu0 0
    %442 = vmatpush1.bf16.msra.mxu0 %v331
    %443 = vmatprep.subr.bf16.mxu0 0
    %444 = vmatpush1.bf16.msra.mxu0 %v332
    %445 = vmatprep.subr.bf16.mxu0 0
    %446 = vmatpush1.bf16.msra.mxu0 %v333
    %447 = vmatprep.mubr.bf16.mxu0 %v161
    %448 = vmatmul.mubr.bf16.gmra.mrb[0].mxu0 %v160
    %v449 = vpop.f32.mrb[0].mxu0
    %v450 = vadd.f32 %v401, %v449
    %v451 = vpop.f32.mrb[0].mxu0
    %v452 = vpop.f32.mrb[0].mxu0
    %v453 = vadd.f32 %v404, %v452
    %v454 = vpop.f32.mrb[0].mxu0
    %455 = vmatprep.mubr.bf16.mxu0 %v165
    %456 = vmatmul.mubr.bf16.gmra.mrb[0].mxu0 %v164
    %v457 = vpop.f32.mrb[0].mxu0
    %v458 = vadd.f32 %v409, %v457
    %v459 = vpop.f32.mrb[0].mxu0
    %v460 = vpop.f32.mrb[0].mxu0
    %v461 = vadd.f32 %v412, %v460
    %v462 = vpop.f32.mrb[0].mxu0
    %463 = vdwg.mxu0
    %v464 = vmax.f32 %v450, 0.0
    %v465 = vmax.f32 %v453, 0.0
    %v466 = vmax.f32 %v458, 0.0
    %v467 = vmax.f32 %v461, 0.0
    %v468 = vpack.c.bf16 %v465, %v464
    %v469 = vpack.c.bf16 %v467, %v466
    %v472 = vunpack.c.l.b16 %v468
    %v473 = vunpack.c.h.b16 %v468
    %v474 = vunpack.c.l.b16 %v469
    %v475 = vunpack.c.h.b16 %v469
    %v476 = vpack.c.b16 %v472, %v472
    %v477 = vpack.c.b16 %v473, %v473
    %v478 = vpack.c.b16 %v474, %v474
    %v479 = vpack.c.b16 %v475, %v475
    %vm484 = vcmask 519168
    %485 = vst.msk [vmem:[#allocation8] sm:$0xf] %vm484, %v476
    %486 = vst.msk [vmem:[#allocation8 + $0x4] sm:$0xf] %vm484, %v477
    %487 = vst.msk [vmem:[#allocation8 + $0x8] sm:$0xf] %vm484, %v478
    %488 = vst.msk [vmem:[#allocation8 + $0xc] sm:$0xf] %vm484, %v479
    // Predicated region
    $region26: #{dqn_forward.5} parent=1 // pred_check
      _
    $region27: #{dqn_forward.5} parent=1 // pred_check_branch
      %490 = sbr.rel (0) target = $region29
    $region28: #{dqn_forward.5} parent=1 // pred_region
      %s492 = ssub.s32 256, 256
      %493 = vsyncadd [#allocation4], %s492
      %s494 = sshll.u32 [#allocation8], 4
      %s495 = int_to_ptr.vmem [resolvable:$true] %s494
      %500 = dma.vmem_to_hbm [thread:$0]  %s495, 256, %s3, [#allocation4], 64, 64, 4
    $region29: #{dqn_forward.5} parent=1 // pred_fallthru
      _
    // Predicated region
    $region30: #{dqn_forward.5} parent=1 // pred_check
      _
    $region31: #{dqn_forward.5} parent=1 // pred_check_branch
      %502 = sbr.rel (0) target = $region33
    $region32: #{dqn_forward.5} parent=1 // pred_region
      %503 = dma.done [#allocation4], 256
    $region33: #{dqn_forward.5} parent=1 // pred_fallthru
      _
    %504 = vsyncpa [#allocation3], 1
    %505 = vsyncpa [#allocation6], 1
    %506 = vsyncpa [#allocation4], 1

// kernel: dqn_forward.6
$region0: #{dqn_forward.6}
  #allocation0 [shape = 'u32[]', space=smem, size = 0x4, offset = 0x4, fixed_abs, tag = 'smem constant byte address 0x4 - core index']
  #allocation1 [shape = 'u32[144,128]{1,0:T(1,128)}', space=vmem, size = 0x12000, scoped, tag = 'internal scratch']
  %s0 = inlined_call_operand.hbm [shape: bf16[8,576], index: 0, kind: input, shape index: {}]
  %s1 = inlined_call_operand.hbm [shape: bf16[576,64], index: 1, kind: input, shape index: {}]
  %s2 = inlined_call_operand.hbm [shape: f32[1,64], index: 2, kind: input, shape index: {}]
  %s3 = inlined_call_operand.hbm [shape: bf16[8,64], index: 3, kind: output, shape index: {}]
  %s4 = sld [smem:[#allocation0]]
  $region34: #{dqn_forward.6} parent=0
    _
  %s6 = ssub.s32 1, %s4
  %s7 = scalar_select 0, %s6, %s4
  $region1: #{dqn_forward.6} parent=0
    #allocation2 [shape = 'u8[10240]{0}', space=vmem, size = 0x2800, scoped, tag = 'input window, operand 0, single buffered']
    #allocation3 [shape = 's32[1]{0}', space=sflag, size = 0x4, scoped, tag = 'scoped memory for dqn_forward.6']
    #allocation4 [shape = 's32[1]{0}', space=sflag, size = 0x4, scoped, tag = 'scoped memory for dqn_forward.6']
    #allocation5 [shape = 'u8[147456]{0}', space=vmem, size = 0x24000, scoped, tag = 'input window, operand 1, single buffered']
    #allocation6 [shape = 's32[1]{0}', space=sflag, size = 0x4, scoped, tag = 'scoped memory for dqn_forward.6']
    #allocation7 [shape = 'u8[512]{0}', space=vmem, size = 0x400, scoped, tag = 'input window, operand 2, single buffered']
    #allocation8 [shape = 'u8[2048]{0}', space=vmem, size = 0x800, scoped, tag = 'output window, operand 0, single buffered']
    %8 = vsyncpa [#allocation3], 0
    %9 = vsyncpa [#allocation6], 0
    %10 = vsyncpa [#allocation4], 0
    // Predicated region
    $region2: #{dqn_forward.6} parent=1 // pred_check
      _
    $region3: #{dqn_forward.6} parent=1 // pred_check_branch
      %12 = sbr.rel (0) target = $region5
    $region4: #{dqn_forward.6} parent=1 // pred_region
      %s14 = ssub.s32 320, 320
      %15 = vsyncadd [#allocation3], %s14
      %s17 = sshll.u32 [#allocation2], 4
      %s18 = int_to_ptr.vmem [resolvable:$true] %s17
      %20 = dma.hbm_to_vmem [thread:$0]  %s0, 320, %s18, [#allocation3]
    $region5: #{dqn_forward.6} parent=1 // pred_fallthru
      _
    // Predicated region
    $region6: #{dqn_forward.6} parent=1 // pred_check
      _
    $region7: #{dqn_forward.6} parent=1 // pred_check_branch
      %22 = sbr.rel (0) target = $region9
    $region8: #{dqn_forward.6} parent=1 // pred_region
      %s24 = ssub.s32 4608, 4608
      %25 = vsyncadd [#allocation6], %s24
      %s26 = sshll.u32 [#allocation5], 4
      %s27 = int_to_ptr.vmem [resolvable:$true] %s26
      %32 = dma.hbm_to_vmem [thread:$0]  %s1, 4608, %s27, [#allocation6], 64, 64, 4
    $region9: #{dqn_forward.6} parent=1 // pred_fallthru
      _
    // Predicated region
    $region10: #{dqn_forward.6} parent=1 // pred_check
      _
    $region11: #{dqn_forward.6} parent=1 // pred_check_branch
      %34 = sbr.rel (0) target = $region13
    $region12: #{dqn_forward.6} parent=1 // pred_region
      %s36 = ssub.s32 16, 16
      %37 = vsyncadd [#allocation6], %s36
      %s39 = sshll.u32 [#allocation7], 4
      %s40 = int_to_ptr.vmem [resolvable:$true] %s39
      %42 = dma.hbm_to_vmem [thread:$0]  %s2, 16, %s40, [#allocation6]
    $region13: #{dqn_forward.6} parent=1 // pred_fallthru
      _
    // Predicated region
    $region14: #{dqn_forward.6} parent=1 // pred_check
      _
    $region15: #{dqn_forward.6} parent=1 // pred_check_branch
      %44 = sbr.rel (0) target = $region17
    $region16: #{dqn_forward.6} parent=1 // pred_region
      %45 = dma.done [#allocation3], 320
    $region17: #{dqn_forward.6} parent=1 // pred_fallthru
      _
    // Predicated region
    $region18: #{dqn_forward.6} parent=1 // pred_check
      _
    $region19: #{dqn_forward.6} parent=1 // pred_check_branch
      %47 = sbr.rel (0) target = $region21
    $region20: #{dqn_forward.6} parent=1 // pred_region
      %48 = dma.done [#allocation6], 4608
    $region21: #{dqn_forward.6} parent=1 // pred_fallthru
      _
    // Predicated region
    $region22: #{dqn_forward.6} parent=1 // pred_check
      _
    $region23: #{dqn_forward.6} parent=1 // pred_check_branch
      %50 = sbr.rel (0) target = $region25
    $region24: #{dqn_forward.6} parent=1 // pred_region
      %51 = dma.done [#allocation6], 16
    $region25: #{dqn_forward.6} parent=1 // pred_fallthru
      _
    %v53 = vld [vmem:[#allocation2] sm:$0xff]
    %v54 = vld [vmem:[#allocation2 + $0x8] sm:$0xff]
    %v55 = vld [vmem:[#allocation2 + $0x10] sm:$0xf]
    %v56 = vld [vmem:[#allocation5] sm:$0xf]
    %v57 = vld [vmem:[#allocation5 + $0x4] sm:$0xf]
    %v58 = vld [vmem:[#allocation5 + $0x8] sm:$0xf]
    %v59 = vld [vmem:[#allocation5 + $0xc] sm:$0xf]
    %v60 = vld [vmem:[#allocation5 + $0x10] sm:$0xf]
    %v61 = vld [vmem:[#allocation5 + $0x14] sm:$0xf]
    %v62 = vld [vmem:[#allocation5 + $0x18] sm:$0xf]
    %v63 = vld [vmem:[#allocation5 + $0x1c] sm:$0xf]
    %v64 = vld [vmem:[#allocation5 + $0x20] sm:$0xf]
    %v65 = vld [vmem:[#allocation5 + $0x24] sm:$0xf]
    %v66 = vld [vmem:[#allocation5 + $0x28] sm:$0xf]
    %v67 = vld [vmem:[#allocation5 + $0x2c] sm:$0xf]
    %v68 = vld [vmem:[#allocation5 + $0x30] sm:$0xf]
    %v69 = vld [vmem:[#allocation5 + $0x34] sm:$0xf]
    %v70 = vld [vmem:[#allocation5 + $0x38] sm:$0xf]
    %v71 = vld [vmem:[#allocation5 + $0x3c] sm:$0xf]
    %v72 = vld [vmem:[#allocation5 + $0x40] sm:$0xf]
    %v73 = vld [vmem:[#allocation5 + $0x44] sm:$0xf]
    %v74 = vld [vmem:[#allocation5 + $0x48] sm:$0xf]
    %v75 = vld [vmem:[#allocation5 + $0x4c] sm:$0xf]
    %v76 = vld [vmem:[#allocation5 + $0x50] sm:$0xf]
    %v77 = vld [vmem:[#allocation5 + $0x54] sm:$0xf]
    %v78 = vld [vmem:[#allocation5 + $0x58] sm:$0xf]
    %v79 = vld [vmem:[#allocation5 + $0x5c] sm:$0xf]
    %v80 = vld [vmem:[#allocation5 + $0x60] sm:$0xf]
    %v81 = vld [vmem:[#allocation5 + $0x64] sm:$0xf]
    %v82 = vld [vmem:[#allocation5 + $0x68] sm:$0xf]
    %v83 = vld [vmem:[#allocation5 + $0x6c] sm:$0xf]
    %v84 = vld [vmem:[#allocation5 + $0x70] sm:$0xf]
    %v85 = vld [vmem:[#allocation5 + $0x74] sm:$0xf]
    %v86 = vld [vmem:[#allocation5 + $0x78] sm:$0xf]
    %v87 = vld [vmem:[#allocation5 + $0x7c] sm:$0xf]
    %v88 = vld [vmem:[#allocation5 + $0x80] sm:$0xf]
    %v89 = vld [vmem:[#allocation5 + $0x84] sm:$0xf]
    %v90 = vld [vmem:[#allocation5 + $0x88] sm:$0xf]
    %v91 = vld [vmem:[#allocation5 + $0x8c] sm:$0xf]
    %v92 = vld [vmem:[#allocation5 + $0x90] sm:$0xf]
    %v93 = vld [vmem:[#allocation5 + $0x94] sm:$0xf]
    %v94 = vld [vmem:[#allocation5 + $0x98] sm:$0xf]
    %v95 = vld [vmem:[#allocation5 + $0x9c] sm:$0xf]
    %v96 = vld [vmem:[#allocation5 + $0xa0] sm:$0xf]
    %v97 = vld [vmem:[#allocation5 + $0xa4] sm:$0xf]
    %v98 = vld [vmem:[#allocation5 + $0xa8] sm:$0xf]
    %v99 = vld [vmem:[#allocation5 + $0xac] sm:$0xf]
    %v100 = vld [vmem:[#allocation5 + $0xb0] sm:$0xf]
    %v101 = vld [vmem:[#allocation5 + $0xb4] sm:$0xf]
    %v102 = vld [vmem:[#allocation5 + $0xb8] sm:$0xf]
    %v103 = vld [vmem:[#allocation5 + $0xbc] sm:$0xf]
    %v104 = vld [vmem:[#allocation5 + $0xc0] sm:$0xf]
    %v105 = vld [vmem:[#allocation5 + $0xc4] sm:$0xf]
    %v106 = vld [vmem:[#allocation5 + $0xc8] sm:$0xf]
    %v107 = vld [vmem:[#allocation5 + $0xcc] sm:$0xf]
    %v108 = vld [vmem:[#allocation5 + $0xd0] sm:$0xf]
    %v109 = vld [vmem:[#allocation5 + $0xd4] sm:$0xf]
    %v110 = vld [vmem:[#allocation5 + $0xd8] sm:$0xf]
    %v111 = vld [vmem:[#allocation5 + $0xdc] sm:$0xf]
    %v112 = vld [vmem:[#allocation5 + $0xe0] sm:$0xf]
    %v113 = vld [vmem:[#allocation5 + $0xe4] sm:$0xf]
    %v114 = vld [vmem:[#allocation5 + $0xe8] sm:$0xf]
    %v115 = vld [vmem:[#allocation5 + $0xec] sm:$0xf]
    %v116 = vld [vmem:[#allocation5 + $0xf0] sm:$0xf]
    %v117 = vld [vmem:[#allocation5 + $0xf4] sm:$0xf]
    %v118 = vld [vmem:[#allocation5 + $0xf8] sm:$0xf]
    %v119 = vld [vmem:[#allocation5 + $0xfc] sm:$0xf]
    %v120 = vld [vmem:[#allocation5 + $0x100] sm:$0xf]
    %v121 = vld [vmem:[#allocation5 + $0x104] sm:$0xf]
    %v122 = vld [vmem:[#allocation5 + $0x108] sm:$0xf]
    %v123 = vld [vmem:[#allocation5 + $0x10c] sm:$0xf]
    %v124 = vld [vmem:[#allocation5 + $0x110] sm:$0xf]
    %v125 = vld [vmem:[#allocation5 + $0x114] sm:$0xf]
    %v126 = vld [vmem:[#allocation5 + $0x118] sm:$0xf]
    %v127 = vld [vmem:[#allocation5 + $0x11c] sm:$0xf]
    %v128 = vld [vmem:[#allocation7] sm:$0x1]
    %v130 = vlaneseq
    %v131 = vshrl.u32 %v130, 7
    %v132 = vsub.s32 0, %v131
    %v133 = vrot.slane %v128, %v132
    %v138 = vunpack.c.l.b16 %v53
    %v139 = vunpack.c.h.b16 %v53
    %v140 = vunpack.c.l.b16 %v54
    %v141 = vunpack.c.h.b16 %v54
    %v142 = vunpack.c.l.b16 %v55
    %v143 = vpack.c.b16 %v138, %v138
    %v144 = vpack.c.b16 %v139, %v139
    %v145 = vpack.c.b16 %v140, %v140
    %v146 = vpack.c.b16 %v141, %v141
    %v147 = vpack.c.b16 %v142, %v142
    %v224 = vunpack.c.l.b16 %v56
    %v225 = vunpack.c.l.b16 %v57
    %v226 = vunpack.c.l.b16 %v58
    %v227 = vunpack.c.l.b16 %v59
    %v228 = vunpack.c.l.b16 %v60
    %v229 = vunpack.c.l.b16 %v61
    %v230 = vunpack.c.l.b16 %v62
    %v231 = vunpack.c.l.b16 %v63
    %v232 = vunpack.c.l.b16 %v64
    %v233 = vunpack.c.l.b16 %v65
    %v234 = vunpack.c.l.b16 %v66
    %v235 = vunpack.c.l.b16 %v67
    %v236 = vunpack.c.l.b16 %v68
    %v237 = vunpack.c.l.b16 %v69
    %v238 = vunpack.c.l.b16 %v70
    %v239 = vunpack.c.l.b16 %v71
    %v240 = vunpack.c.l.b16 %v72
    %v241 = vunpack.c.l.b16 %v73
    %v242 = vunpack.c.l.b16 %v74
    %v243 = vunpack.c.l.b16 %v75
    %v244 = vunpack.c.l.b16 %v76
    %v245 = vunpack.c.l.b16 %v77
    %v246 = vunpack.c.l.b16 %v78
    %v247 = vunpack.c.l.b16 %v79
    %v248 = vunpack.c.l.b16 %v80
    %v249 = vunpack.c.l.b16 %v81
    %v250 = vunpack.c.l.b16 %v82
    %v251 = vunpack.c.l.b16 %v83
    %v252 = vunpack.c.l.b16 %v84
    %v253 = vunpack.c.l.b16 %v85
    %v254 = vunpack.c.l.b16 %v86
    %v255 = vunpack.c.l.b16 %v87
    %v256 = vunpack.c.l.b16 %v88
    %v257 = vunpack.c.l.b16 %v89
    %v258 = vunpack.c.l.b16 %v90
    %v259 = vunpack.c.l.b16 %v91
    %v260 = vunpack.c.l.b16 %v92
    %v261 = vunpack.c.l.b16 %v93
    %v262 = vunpack.c.l.b16 %v94
    %v263 = vunpack.c.l.b16 %v95
    %v264 = vunpack.c.l.b16 %v96
    %v265 = vunpack.c.l.b16 %v97
    %v266 = vunpack.c.l.b16 %v98
    %v267 = vunpack.c.l.b16 %v99
    %v268 = vunpack.c.l.b16 %v100
    %v269 = vunpack.c.l.b16 %v101
    %v270 = vunpack.c.l.b16 %v102
    %v271 = vunpack.c.l.b16 %v103
    %v272 = vunpack.c.l.b16 %v104
    %v273 = vunpack.c.l.b16 %v105
    %v274 = vunpack.c.l.b16 %v106
    %v275 = vunpack.c.l.b16 %v107
    %v276 = vunpack.c.l.b16 %v108
    %v277 = vunpack.c.l.b16 %v109
    %v278 = vunpack.c.l.b16 %v110
    %v279 = vunpack.c.l.b16 %v111
    %v280 = vunpack.c.l.b16 %v112
    %v281 = vunpack.c.l.b16 %v113
    %v282 = vunpack.c.l.b16 %v114
    %v283 = vunpack.c.l.b16 %v115
    %v284 = vunpack.c.l.b16 %v116
    %v285 = vunpack.c.l.b16 %v117
    %v286 = vunpack.c.l.b16 %v118
    %v287 = vunpack.c.l.b16 %v119
    %v288 = vunpack.c.l.b16 %v120
    %v289 = vunpack.c.l.b16 %v121
    %v290 = vunpack.c.l.b16 %v122
    %v291 = vunpack.c.l.b16 %v123
    %v292 = vunpack.c.l.b16 %v124
    %v293 = vunpack.c.l.b16 %v125
    %v294 = vunpack.c.l.b16 %v126
    %v295 = vunpack.c.l.b16 %v127
    %v296 = vpack.c.b16 %v225, %v224
    %v297 = vpack.c.b16 %v227, %v226
    %v298 = vpack.c.b16 %v229, %v228
    %v299 = vpack.c.b16 %v231, %v230
    %v300 = vpack.c.b16 %v233, %v232
    %v301 = vpack.c.b16 %v235, %v234
    %v302 = vpack.c.b16 %v237, %v236
    %v303 = vpack.c.b16 %v239, %v238
    %v304 = vpack.c.b16 %v241, %v240
    %v305 = vpack.c.b16 %v243, %v242
    %v306 = vpack.c.b16 %v245, %v244
    %v307 = vpack.c.b16 %v247, %v246
    %v308 = vpack.c.b16 %v249, %v248
    %v309 = vpack.c.b16 %v251, %v250
    %v310 = vpack.c.b16 %v253, %v252
    %v311 = vpack.c.b16 %v255, %v254
    %v312 = vpack.c.b16 %v257, %v256
    %v313 = vpack.c.b16 %v259, %v258
    %v314 = vpack.c.b16 %v261, %v260
    %v315 = vpack.c.b16 %v263, %v262
    %v316 = vpack.c.b16 %v265, %v264
    %v317 = vpack.c.b16 %v267, %v266
    %v318 = vpack.c.b16 %v269, %v268
    %v319 = vpack.c.b16 %v271, %v270
    %v320 = vpack.c.b16 %v273, %v272
    %v321 = vpack.c.b16 %v275, %v274
    %v322 = vpack.c.b16 %v277, %v276
    %v323 = vpack.c.b16 %v279, %v278
    %v324 = vpack.c.b16 %v281, %v280
    %v325 = vpack.c.b16 %v283, %v282
    %v326 = vpack.c.b16 %v285, %v284
    %v327 = vpack.c.b16 %v287, %v286
    %v328 = vpack.c.b16 %v289, %v288
    %v329 = vpack.c.b16 %v291, %v290
    %v330 = vpack.c.b16 %v293, %v292
    %v331 = vpack.c.b16 %v295, %v294
    %vm368 = vcmask 523264
    %v370 = vsel %vm368, %v147, 0
    %372 = vmatprep.subr.bf16.mxu0 0
    %373 = vmatpush1.bf16.msra.mxu0 %v296
    %374 = vmatprep.subr.bf16.mxu0 0
    %375 = vmatpush1.bf16.msra.mxu0 %v297
    %376 = vmatprep.subr.bf16.mxu0 0
    %377 = vmatpush1.bf16.msra.mxu0 %v298
    %378 = vmatprep.subr.bf16.mxu0 0
    %379 = vmatpush1.bf16.msra.mxu0 %v299
    %380 = vmatprep.subr.bf16.mxu0 0
    %381 = vmatpush1.bf16.msra.mxu0 %v300
    %382 = vmatprep.subr.bf16.mxu0 0
    %383 = vmatpush1.bf16.msra.mxu0 %v301
    %384 = vmatprep.subr.bf16.mxu0 0
    %385 = vmatpush1.bf16.msra.mxu0 %v302
    %386 = vmatprep.subr.bf16.mxu0 0
    %387 = vmatpush1.bf16.msra.mxu0 %v303
    %388 = vmatprep.subr.bf16.mxu0 0
    %389 = vmatpush1.bf16.msra.mxu0 %v304
    %390 = vmatprep.subr.bf16.mxu0 0
    %391 = vmatpush1.bf16.msra.mxu0 %v305
    %392 = vmatprep.subr.bf16.mxu0 0
    %393 = vmatpush1.bf16.msra.mxu0 %v306
    %394 = vmatprep.subr.bf16.mxu0 0
    %395 = vmatpush1.bf16.msra.mxu0 %v307
    %396 = vmatprep.subr.bf16.mxu0 0
    %397 = vmatpush1.bf16.msra.mxu0 %v308
    %398 = vmatprep.subr.bf16.mxu0 0
    %399 = vmatpush1.bf16.msra.mxu0 %v309
    %400 = vmatprep.subr.bf16.mxu0 0
    %401 = vmatpush1.bf16.msra.mxu0 %v310
    %402 = vmatprep.subr.bf16.mxu0 0
    %403 = vmatpush1.bf16.msra.mxu0 %v311
    %404 = vmatprep.mubr.bf16.mxu0 %v144
    %405 = vmatmul.mubr.bf16.gmra.mrb[0].mxu0 %v143
    %v406 = vpop.f32.mrb[0].mxu0
    %v407 = vadd.f32 %v133, %v406
    %v408 = vpop.f32.mrb[0].mxu0
    %v409 = vpop.f32.mrb[0].mxu0
    %v410 = vpop.f32.mrb[0].mxu0
    %411 = vdwg.mxu0
    %412 = vmatprep.subr.bf16.mxu0 0
    %413 = vmatpush1.bf16.msra.mxu0 %v312
    %414 = vmatprep.subr.bf16.mxu0 0
    %415 = vmatpush1.bf16.msra.mxu0 %v313
    %416 = vmatprep.subr.bf16.mxu0 0
    %417 = vmatpush1.bf16.msra.mxu0 %v314
    %418 = vmatprep.subr.bf16.mxu0 0
    %419 = vmatpush1.bf16.msra.mxu0 %v315
    %420 = vmatprep.subr.bf16.mxu0 0
    %421 = vmatpush1.bf16.msra.mxu0 %v316
    %422 = vmatprep.subr.bf16.mxu0 0
    %423 = vmatpush1.bf16.msra.mxu0 %v317
    %424 = vmatprep.subr.bf16.mxu0 0
    %425 = vmatpush1.bf16.msra.mxu0 %v318
    %426 = vmatprep.subr.bf16.mxu0 0
    %427 = vmatpush1.bf16.msra.mxu0 %v319
    %428 = vmatprep.subr.bf16.mxu0 0
    %429 = vmatpush1.bf16.msra.mxu0 %v320
    %430 = vmatprep.subr.bf16.mxu0 0
    %431 = vmatpush1.bf16.msra.mxu0 %v321
    %432 = vmatprep.subr.bf16.mxu0 0
    %433 = vmatpush1.bf16.msra.mxu0 %v322
    %434 = vmatprep.subr.bf16.mxu0 0
    %435 = vmatpush1.bf16.msra.mxu0 %v323
    %436 = vmatprep.subr.bf16.mxu0 0
    %437 = vmatpush1.bf16.msra.mxu0 %v324
    %438 = vmatprep.subr.bf16.mxu0 0
    %439 = vmatpush1.bf16.msra.mxu0 %v325
    %440 = vmatprep.subr.bf16.mxu0 0
    %441 = vmatpush1.bf16.msra.mxu0 %v326
    %442 = vmatprep.subr.bf16.mxu0 0
    %443 = vmatpush1.bf16.msra.mxu0 %v327
    %444 = vmatprep.mubr.bf16.mxu0 %v146
    %445 = vmatmul.mubr.bf16.gmra.mrb[0].mxu0 %v145
    %v446 = vpop.f32.mrb[0].mxu0
    %v447 = vadd.f32 %v407, %v446
    %v448 = vpop.f32.mrb[0].mxu0
    %v449 = vpop.f32.mrb[0].mxu0
    %v450 = vpop.f32.mrb[0].mxu0
    %451 = vdwg.mxu0
    %452 = vmatprep.subr.bf16.mxu0 0
    %453 = vmatpush1.bf16.msra.mxu0 %v328
    %454 = vmatprep.subr.bf16.mxu0 0
    %455 = vmatpush1.bf16.msra.mxu0 %v329
    %456 = vmatprep.subr.bf16.mxu0 0
    %457 = vmatpush1.bf16.msra.mxu0 %v330
    %458 = vmatprep.subr.bf16.mxu0 0
    %459 = vmatpush1.bf16.msra.mxu0 %v331
    %460 = vmatprep.subr.bf16.mxu0 0
    %461 = vmatpush1.bf16.msra.mxu0 0
    %462 = vmatprep.subr.bf16.mxu0 0
    %463 = vmatpush1.bf16.msra.mxu0 0
    %464 = vmatprep.subr.bf16.mxu0 0
    %465 = vmatpush1.bf16.msra.mxu0 0
    %466 = vmatprep.subr.bf16.mxu0 0
    %467 = vmatpush1.bf16.msra.mxu0 0
    %468 = vmatprep.subr.bf16.mxu0 0
    %469 = vmatpush1.bf16.msra.mxu0 0
    %470 = vmatprep.subr.bf16.mxu0 0
    %471 = vmatpush1.bf16.msra.mxu0 0
    %472 = vmatprep.subr.bf16.mxu0 0
    %473 = vmatpush1.bf16.msra.mxu0 0
    %474 = vmatprep.subr.bf16.mxu0 0
    %475 = vmatpush1.bf16.msra.mxu0 0
    %476 = vmatprep.subr.bf16.mxu0 0
    %477 = vmatpush1.bf16.msra.mxu0 0
    %478 = vmatprep.subr.bf16.mxu0 0
    %479 = vmatpush1.bf16.msra.mxu0 0
    %480 = vmatprep.subr.bf16.mxu0 0
    %481 = vmatpush1.bf16.msra.mxu0 0
    %482 = vmatprep.subr.bf16.mxu0 0
    %483 = vmatpush1.bf16.msra.mxu0 0
    %484 = vmatprep.mubr.bf16.mxu0 0
    %485 = vmatmul.mubr.bf16.gmra.mrb[0].mxu0 %v370
    %v486 = vpop.f32.mrb[0].mxu0
    %v487 = vadd.f32 %v447, %v486
    %v488 = vpop.f32.mrb[0].mxu0
    %v489 = vpop.f32.mrb[0].mxu0
    %v490 = vpop.f32.mrb[0].mxu0
    %491 = vdwg.mxu0
    %v492 = vmax.f32 %v487, 0.0
    %v493 = vpack.c.bf16 %v492, %v492
    %vm494 = vcmask 519168
    %495 = vst.msk [vmem:[#allocation8] sm:$0xf] %vm494, %v493
    // Predicated region
    $region26: #{dqn_forward.6} parent=1 // pred_check
      _
    $region27: #{dqn_forward.6} parent=1 // pred_check_branch
      %497 = sbr.rel (0) target = $region29
    $region28: #{dqn_forward.6} parent=1 // pred_region
      %s499 = ssub.s32 64, 64
      %500 = vsyncadd [#allocation4], %s499
      %s502 = sshll.u32 [#allocation8], 4
      %s503 = int_to_ptr.vmem [resolvable:$true] %s502
      %505 = dma.vmem_to_hbm [thread:$0]  %s503, 64, %s3, [#allocation4]
    $region29: #{dqn_forward.6} parent=1 // pred_fallthru
      _
    // Predicated region
    $region30: #{dqn_forward.6} parent=1 // pred_check
      _
    $region31: #{dqn_forward.6} parent=1 // pred_check_branch
      %507 = sbr.rel (0) target = $region33
    $region32: #{dqn_forward.6} parent=1 // pred_region
      %508 = dma.done [#allocation4], 64
    $region33: #{dqn_forward.6} parent=1 // pred_fallthru
      _
    %509 = vsyncpa [#allocation3], 1
    %510 = vsyncpa [#allocation6], 1
    %511 = vsyncpa [#allocation4], 1

// kernel: dqn_forward.7
$region0: #{dqn_forward.7}
  #allocation0 [shape = 'u32[]', space=smem, size = 0x4, offset = 0x4, fixed_abs, tag = 'smem constant byte address 0x4 - core index']
  #allocation1 [shape = 'u32[144,128]{1,0:T(1,128)}', space=vmem, size = 0x12000, scoped, tag = 'internal scratch']
  %s0 = inlined_call_operand.hbm [shape: bf16[2,256], index: 0, kind: input, shape index: {}]
  %s1 = inlined_call_operand.hbm [shape: bf16[256,512], index: 1, kind: input, shape index: {}]
  %s2 = inlined_call_operand.hbm [shape: f32[1,512], index: 2, kind: input, shape index: {}]
  %s3 = inlined_call_operand.hbm [shape: bf16[512,128], index: 3, kind: input, shape index: {}]
  %s4 = inlined_call_operand.hbm [shape: f32[1,128], index: 4, kind: input, shape index: {}]
  %s5 = inlined_call_operand.hbm [shape: f32[2,128], index: 5, kind: output, shape index: {}]
  %s6 = sld [smem:[#allocation0]]
  $region50: #{dqn_forward.7} parent=0
    _
  %s8 = ssub.s32 1, %s6
  %s9 = scalar_select 0, %s8, %s6
  $region1: #{dqn_forward.7} parent=0
    #allocation2 [shape = 'u8[1024]{0}', space=vmem, size = 0x400, scoped, tag = 'input window, operand 0, single buffered']
    #allocation3 [shape = 's32[1]{0}', space=sflag, size = 0x4, scoped, tag = 'scoped memory for dqn_forward.7']
    #allocation4 [shape = 's32[1]{0}', space=sflag, size = 0x4, scoped, tag = 'scoped memory for dqn_forward.7']
    #allocation5 [shape = 'u8[262144]{0}', space=vmem, size = 0x40000, scoped, tag = 'input window, operand 1, single buffered']
    #allocation6 [shape = 's32[1]{0}', space=sflag, size = 0x4, scoped, tag = 'scoped memory for dqn_forward.7']
    #allocation7 [shape = 'u8[2048]{0}', space=vmem, size = 0x800, scoped, tag = 'input window, operand 2, single buffered']
    #allocation8 [shape = 'u8[131072]{0}', space=vmem, size = 0x20000, scoped, tag = 'input window, operand 3, single buffered']
    #allocation9 [shape = 's32[1]{0}', space=sflag, size = 0x4, scoped, tag = 'scoped memory for dqn_forward.7']
    #allocation10 [shape = 'u8[512]{0}', space=vmem, size = 0x400, scoped, tag = 'input window, operand 4, single buffered']
    #allocation11 [shape = 'u8[1024]{0}', space=vmem, size = 0x400, scoped, tag = 'output window, operand 0, single buffered']
    %10 = vsyncpa [#allocation3], 0
    %11 = vsyncpa [#allocation6], 0
    %12 = vsyncpa [#allocation9], 0
    %13 = vsyncpa [#allocation4], 0
    // Predicated region
    $region2: #{dqn_forward.7} parent=1 // pred_check
      _
    $region3: #{dqn_forward.7} parent=1 // pred_check_branch
      %15 = sbr.rel (0) target = $region5
    $region4: #{dqn_forward.7} parent=1 // pred_region
      %s17 = ssub.s32 32, 32
      %18 = vsyncadd [#allocation3], %s17
      %s20 = sshll.u32 [#allocation2], 4
      %s21 = int_to_ptr.vmem [resolvable:$true] %s20
      %23 = dma.hbm_to_vmem [thread:$0]  %s0, 32, %s21, [#allocation3]
    $region5: #{dqn_forward.7} parent=1 // pred_fallthru
      _
    // Predicated region
    $region6: #{dqn_forward.7} parent=1 // pred_check
      _
    $region7: #{dqn_forward.7} parent=1 // pred_check_branch
      %25 = sbr.rel (0) target = $region9
    $region8: #{dqn_forward.7} parent=1 // pred_region
      %s27 = ssub.s32 8192, 8192
      %28 = vsyncadd [#allocation6], %s27
      %s29 = sshll.u32 [#allocation5], 4
      %s30 = int_to_ptr.vmem [resolvable:$true] %s29
      %35 = dma.hbm_to_vmem [thread:$0]  %s1, 8192, %s30, [#allocation6], 256, 256, 16
    $region9: #{dqn_forward.7} parent=1 // pred_fallthru
      _
    // Predicated region
    $region10: #{dqn_forward.7} parent=1 // pred_check
      _
    $region11: #{dqn_forward.7} parent=1 // pred_check_branch
      %37 = sbr.rel (0) target = $region13
    $region12: #{dqn_forward.7} parent=1 // pred_region
      %s39 = ssub.s32 64, 64
      %40 = vsyncadd [#allocation6], %s39
      %s42 = sshll.u32 [#allocation7], 4
      %s43 = int_to_ptr.vmem [resolvable:$true] %s42
      %45 = dma.hbm_to_vmem [thread:$0]  %s2, 64, %s43, [#allocation6]
    $region13: #{dqn_forward.7} parent=1 // pred_fallthru
      _
    // Predicated region
    $region14: #{dqn_forward.7} parent=1 // pred_check
      _
    $region15: #{dqn_forward.7} parent=1 // pred_check_branch
      %47 = sbr.rel (0) target = $region17
    $region16: #{dqn_forward.7} parent=1 // pred_region
      %s49 = ssub.s32 4096, 4096
      %50 = vsyncadd [#allocation9], %s49
      %s51 = sshll.u32 [#allocation8], 4
      %s52 = int_to_ptr.vmem [resolvable:$true] %s51
      %57 = dma.hbm_to_vmem [thread:$0]  %s3, 4096, %s52, [#allocation9], 64, 64, 4
    $region17: #{dqn_forward.7} parent=1 // pred_fallthru
      _
    // Predicated region
    $region18: #{dqn_forward.7} parent=1 // pred_check
      _
    $region19: #{dqn_forward.7} parent=1 // pred_check_branch
      %59 = sbr.rel (0) target = $region21
    $region20: #{dqn_forward.7} parent=1 // pred_region
      %s61 = ssub.s32 16, 16
      %62 = vsyncadd [#allocation9], %s61
      %s64 = sshll.u32 [#allocation10], 4
      %s65 = int_to_ptr.vmem [resolvable:$true] %s64
      %67 = dma.hbm_to_vmem [thread:$0]  %s4, 16, %s65, [#allocation9]
    $region21: #{dqn_forward.7} parent=1 // pred_fallthru
      _
    // Predicated region
    $region22: #{dqn_forward.7} parent=1 // pred_check
      _
    $region23: #{dqn_forward.7} parent=1 // pred_check_branch
      %69 = sbr.rel (0) target = $region25
    $region24: #{dqn_forward.7} parent=1 // pred_region
      %70 = dma.done [#allocation3], 32
    $region25: #{dqn_forward.7} parent=1 // pred_fallthru
      _
    // Predicated region
    $region26: #{dqn_forward.7} parent=1 // pred_check
      _
    $region27: #{dqn_forward.7} parent=1 // pred_check_branch
      %72 = sbr.rel (0) target = $region29
    $region28: #{dqn_forward.7} parent=1 // pred_region
      %73 = dma.done [#allocation6], 8192
    $region29: #{dqn_forward.7} parent=1 // pred_fallthru
      _
    // Predicated region
    $region30: #{dqn_forward.7} parent=1 // pred_check
      _
    $region31: #{dqn_forward.7} parent=1 // pred_check_branch
      %75 = sbr.rel (0) target = $region33
    $region32: #{dqn_forward.7} parent=1 // pred_region
      %76 = dma.done [#allocation6], 64
    $region33: #{dqn_forward.7} parent=1 // pred_fallthru
      _
    // Predicated region
    $region34: #{dqn_forward.7} parent=1 // pred_check
      _
    $region35: #{dqn_forward.7} parent=1 // pred_check_branch
      %78 = sbr.rel (0) target = $region37
    $region36: #{dqn_forward.7} parent=1 // pred_region
      %79 = dma.done [#allocation9], 4096
    $region37: #{dqn_forward.7} parent=1 // pred_fallthru
      _
    // Predicated region
    $region38: #{dqn_forward.7} parent=1 // pred_check
      _
    $region39: #{dqn_forward.7} parent=1 // pred_check_branch
      %81 = sbr.rel (0) target = $region41
    $region40: #{dqn_forward.7} parent=1 // pred_region
      %82 = dma.done [#allocation9], 16
    $region41: #{dqn_forward.7} parent=1 // pred_fallthru
      _
    %v84 = vld [vmem:[#allocation2] sm:$0x3]
    %v85 = vld [vmem:[#allocation5] sm:$0xff]
    %v86 = vld [vmem:[#allocation5 + $0x8] sm:$0xff]
    %v87 = vld [vmem:[#allocation5 + $0x10] sm:$0xff]
    %v88 = vld [vmem:[#allocation5 + $0x18] sm:$0xff]
    %v89 = vld [vmem:[#allocation5 + $0x20] sm:$0xff]
    %v90 = vld [vmem:[#allocation5 + $0x28] sm:$0xff]
    %v91 = vld [vmem:[#allocation5 + $0x30] sm:$0xff]
    %v92 = vld [vmem:[#allocation5 + $0x38] sm:$0xff]
    %v93 = vld [vmem:[#allocation5 + $0x40] sm:$0xff]
    %v94 = vld [vmem:[#allocation5 + $0x48] sm:$0xff]
    %v95 = vld [vmem:[#allocation5 + $0x50] sm:$0xff]
    %v96 = vld [vmem:[#allocation5 + $0x58] sm:$0xff]
    %v97 = vld [vmem:[#allocation5 + $0x60] sm:$0xff]
    %v98 = vld [vmem:[#allocation5 + $0x68] sm:$0xff]
    %v99 = vld [vmem:[#allocation5 + $0x70] sm:$0xff]
    %v100 = vld [vmem:[#allocation5 + $0x78] sm:$0xff]
    %v101 = vld [vmem:[#allocation5 + $0x80] sm:$0xff]
    %v102 = vld [vmem:[#allocation5 + $0x88] sm:$0xff]
    %v103 = vld [vmem:[#allocation5 + $0x90] sm:$0xff]
    %v104 = vld [vmem:[#allocation5 + $0x98] sm:$0xff]
    %v105 = vld [vmem:[#allocation5 + $0xa0] sm:$0xff]
    %v106 = vld [vmem:[#allocation5 + $0xa8] sm:$0xff]
    %v107 = vld [vmem:[#allocation5 + $0xb0] sm:$0xff]
    %v108 = vld [vmem:[#allocation5 + $0xb8] sm:$0xff]
    %v109 = vld [vmem:[#allocation5 + $0xc0] sm:$0xff]
    %v110 = vld [vmem:[#allocation5 + $0xc8] sm:$0xff]
    %v111 = vld [vmem:[#allocation5 + $0xd0] sm:$0xff]
    %v112 = vld [vmem:[#allocation5 + $0xd8] sm:$0xff]
    %v113 = vld [vmem:[#allocation5 + $0xe0] sm:$0xff]
    %v114 = vld [vmem:[#allocation5 + $0xe8] sm:$0xff]
    %v115 = vld [vmem:[#allocation5 + $0xf0] sm:$0xff]
    %v116 = vld [vmem:[#allocation5 + $0xf8] sm:$0xff]
    %v117 = vld [vmem:[#allocation5 + $0x100] sm:$0xff]
    %v118 = vld [vmem:[#allocation5 + $0x108] sm:$0xff]
    %v119 = vld [vmem:[#allocation5 + $0x110] sm:$0xff]
    %v120 = vld [vmem:[#allocation5 + $0x118] sm:$0xff]
    %v121 = vld [vmem:[#allocation5 + $0x120] sm:$0xff]
    %v122 = vld [vmem:[#allocation5 + $0x128] sm:$0xff]
    %v123 = vld [vmem:[#allocation5 + $0x130] sm:$0xff]
    %v124 = vld [vmem:[#allocation5 + $0x138] sm:$0xff]
    %v125 = vld [vmem:[#allocation5 + $0x140] sm:$0xff]
    %v126 = vld [vmem:[#allocation5 + $0x148] sm:$0xff]
    %v127 = vld [vmem:[#allocation5 + $0x150] sm:$0xff]
    %v128 = vld [vmem:[#allocation5 + $0x158] sm:$0xff]
    %v129 = vld [vmem:[#allocation5 + $0x160] sm:$0xff]
    %v130 = vld [vmem:[#allocation5 + $0x168] sm:$0xff]
    %v131 = vld [vmem:[#allocation5 + $0x170] sm:$0xff]
    %v132 = vld [vmem:[#allocation5 + $0x178] sm:$0xff]
    %v133 = vld [vmem:[#allocation5 + $0x180] sm:$0xff]
    %v134 = vld [vmem:[#allocation5 + $0x188] sm:$0xff]
    %v135 = vld [vmem:[#allocation5 + $0x190] sm:$0xff]
    %v136 = vld [vmem:[#allocation5 + $0x198] sm:$0xff]
    %v137 = vld [vmem:[#allocation5 + $0x1a0] sm:$0xff]
    %v138 = vld [vmem:[#allocation5 + $0x1a8] sm:$0xff]
    %v139 = vld [vmem:[#allocation5 + $0x1b0] sm:$0xff]
    %v140 = vld [vmem:[#allocation5 + $0x1b8] sm:$0xff]
    %v141 = vld [vmem:[#allocation5 + $0x1c0] sm:$0xff]
    %v142 = vld [vmem:[#allocation5 + $0x1c8] sm:$0xff]
    %v143 = vld [vmem:[#allocation5 + $0x1d0] sm:$0xff]
    %v144 = vld [vmem:[#allocation5 + $0x1d8] sm:$0xff]
    %v145 = vld [vmem:[#allocation5 + $0x1e0] sm:$0xff]
    %v146 = vld [vmem:[#allocation5 + $0x1e8] sm:$0xff]
    %v147 = vld [vmem:[#allocation5 + $0x1f0] sm:$0xff]
    %v148 = vld [vmem:[#allocation5 + $0x1f8] sm:$0xff]
    %v149 = vld [vmem:[#allocation7] sm:$0xf]
    %v151 = vlaneseq
    %v152 = vshrl.u32 %v151, 7
    %v153 = vsub.s32 0, %v152
    %v154 = vrot.slane %v149, %v153
    %v155 = vlaneseq
    %v156 = vshrl.u32 %v155, 7
    %v157 = vsub.s32 1, %v156
    %v158 = vrot.slane %v149, %v157
    %v159 = vlaneseq
    %v160 = vshrl.u32 %v159, 7
    %v161 = vsub.s32 2, %v160
    %v162 = vrot.slane %v149, %v161
    %v163 = vlaneseq
    %v164 = vshrl.u32 %v163, 7
    %v165 = vsub.s32 3, %v164
    %v166 = vrot.slane %v149, %v165
    %v173 = vunpack.c.l.s4 1966171168
    %v174 = vunpack.c.0.s8 %v173
    %v175 = vlaneseq
    %v176 = vshrl.u32 %v175, 7
    %v177 = vsub.s32 %v174, %v176
    %v178 = vrot.slane %v84, %v177
    %v179 = vcombine.high %v178, %v178
    %v181 = vunpack.c.l.s4 1966171168
    %v182 = vunpack.c.0.s8 %v181
    %v183 = vlaneseq
    %v184 = vshrl.u32 %v183, 7
    %v185 = vsub.s32 %v182, %v184
    %v186 = vrot.slane %v178, %v185
    %v188 = vunpack.c.l.s4 1966171168
    %v189 = vunpack.c.0.s8 %v188
    %v190 = vlaneseq
    %v191 = vshrl.u32 %v190, 7
    %v192 = vsub.s32 %v189, %v191
    %v193 = vrot.slane %v179, %v192
    %v260 = vunpack.c.l.b16 %v85
    %v261 = vunpack.c.h.b16 %v85
    %v262 = vunpack.c.l.b16 %v86
    %v263 = vunpack.c.h.b16 %v86
    %v264 = vunpack.c.l.b16 %v87
    %v265 = vunpack.c.h.b16 %v87
    %v266 = vunpack.c.l.b16 %v88
    %v267 = vunpack.c.h.b16 %v88
    %v268 = vunpack.c.l.b16 %v89
    %v269 = vunpack.c.h.b16 %v89
    %v270 = vunpack.c.l.b16 %v90
    %v271 = vunpack.c.h.b16 %v90
    %v272 = vunpack.c.l.b16 %v91
    %v273 = vunpack.c.h.b16 %v91
    %v274 = vunpack.c.l.b16 %v92
    %v275 = vunpack.c.h.b16 %v92
    %v276 = vunpack.c.l.b16 %v93
    %v277 = vunpack.c.h.b16 %v93
    %v278 = vunpack.c.l.b16 %v94
    %v279 = vunpack.c.h.b16 %v94
    %v280 = vunpack.c.l.b16 %v95
    %v281 = vunpack.c.h.b16 %v95
    %v282 = vunpack.c.l.b16 %v96
    %v283 = vunpack.c.h.b16 %v96
    %v284 = vunpack.c.l.b16 %v97
    %v285 = vunpack.c.h.b16 %v97
    %v286 = vunpack.c.l.b16 %v98
    %v287 = vunpack.c.h.b16 %v98
    %v288 = vunpack.c.l.b16 %v99
    %v289 = vunpack.c.h.b16 %v99
    %v290 = vunpack.c.l.b16 %v100
    %v291 = vunpack.c.h.b16 %v100
    %v292 = vunpack.c.l.b16 %v101
    %v293 = vunpack.c.h.b16 %v101
    %v294 = vunpack.c.l.b16 %v102
    %v295 = vunpack.c.h.b16 %v102
    %v296 = vunpack.c.l.b16 %v103
    %v297 = vunpack.c.h.b16 %v103
    %v298 = vunpack.c.l.b16 %v104
    %v299 = vunpack.c.h.b16 %v104
    %v300 = vunpack.c.l.b16 %v105
    %v301 = vunpack.c.h.b16 %v105
    %v302 = vunpack.c.l.b16 %v106
    %v303 = vunpack.c.h.b16 %v106
    %v304 = vunpack.c.l.b16 %v107
    %v305 = vunpack.c.h.b16 %v107
    %v306 = vunpack.c.l.b16 %v108
    %v307 = vunpack.c.h.b16 %v108
    %v308 = vunpack.c.l.b16 %v109
    %v309 = vunpack.c.h.b16 %v109
    %v310 = vunpack.c.l.b16 %v110
    %v311 = vunpack.c.h.b16 %v110
    %v312 = vunpack.c.l.b16 %v111
    %v313 = vunpack.c.h.b16 %v111
    %v314 = vunpack.c.l.b16 %v112
    %v315 = vunpack.c.h.b16 %v112
    %v316 = vunpack.c.l.b16 %v113
    %v317 = vunpack.c.h.b16 %v113
    %v318 = vunpack.c.l.b16 %v114
    %v319 = vunpack.c.h.b16 %v114
    %v320 = vunpack.c.l.b16 %v115
    %v321 = vunpack.c.h.b16 %v115
    %v322 = vunpack.c.l.b16 %v116
    %v323 = vunpack.c.h.b16 %v116
    %v324 = vunpack.c.l.b16 %v117
    %v325 = vunpack.c.h.b16 %v117
    %v326 = vunpack.c.l.b16 %v118
    %v327 = vunpack.c.h.b16 %v118
    %v328 = vunpack.c.l.b16 %v119
    %v329 = vunpack.c.h.b16 %v119
    %v330 = vunpack.c.l.b16 %v120
    %v331 = vunpack.c.h.b16 %v120
    %v332 = vunpack.c.l.b16 %v121
    %v333 = vunpack.c.h.b16 %v121
    %v334 = vunpack.c.l.b16 %v122
    %v335 = vunpack.c.h.b16 %v122
    %v336 = vunpack.c.l.b16 %v123
    %v337 = vunpack.c.h.b16 %v123
    %v338 = vunpack.c.l.b16 %v124
    %v339 = vunpack.c.h.b16 %v124
    %v340 = vunpack.c.l.b16 %v125
    %v341 = vunpack.c.h.b16 %v125
    %v342 = vunpack.c.l.b16 %v126
    %v343 = vunpack.c.h.b16 %v126
    %v344 = vunpack.c.l.b16 %v127
    %v345 = vunpack.c.h.b16 %v127
    %v346 = vunpack.c.l.b16 %v128
    %v347 = vunpack.c.h.b16 %v128
    %v348 = vunpack.c.l.b16 %v129
    %v349 = vunpack.c.h.b16 %v129
    %v350 = vunpack.c.l.b16 %v130
    %v351 = vunpack.c.h.b16 %v130
    %v352 = vunpack.c.l.b16 %v131
    %v353 = vunpack.c.h.b16 %v131
    %v354 = vunpack.c.l.b16 %v132
    %v355 = vunpack.c.h.b16 %v132
    %v356 = vunpack.c.l.b16 %v133
    %v357 = vunpack.c.h.b16 %v133
    %v358 = vunpack.c.l.b16 %v134
    %v359 = vunpack.c.h.b16 %v134
    %v360 = vunpack.c.l.b16 %v135
    %v361 = vunpack.c.h.b16 %v135
    %v362 = vunpack.c.l.b16 %v136
    %v363 = vunpack.c.h.b16 %v136
    %v364 = vunpack.c.l.b16 %v137
    %v365 = vunpack.c.h.b16 %v137
    %v366 = vunpack.c.l.b16 %v138
    %v367 = vunpack.c.h.b16 %v138
    %v368 = vunpack.c.l.b16 %v139
    %v369 = vunpack.c.h.b16 %v139
    %v370 = vunpack.c.l.b16 %v140
    %v371 = vunpack.c.h.b16 %v140
    %v372 = vunpack.c.l.b16 %v141
    %v373 = vunpack.c.h.b16 %v141
    %v374 = vunpack.c.l.b16 %v142
    %v375 = vunpack.c.h.b16 %v142
    %v376 = vunpack.c.l.b16 %v143
    %v377 = vunpack.c.h.b16 %v143
    %v378 = vunpack.c.l.b16 %v144
    %v379 = vunpack.c.h.b16 %v144
    %v380 = vunpack.c.l.b16 %v145
    %v381 = vunpack.c.h.b16 %v145
    %v382 = vunpack.c.l.b16 %v146
    %v383 = vunpack.c.h.b16 %v146
    %v384 = vunpack.c.l.b16 %v147
    %v385 = vunpack.c.h.b16 %v147
    %v386 = vunpack.c.l.b16 %v148
    %v387 = vunpack.c.h.b16 %v148
    %v388 = vpack.c.b16 %v264, %v260
    %v389 = vpack.c.b16 %v265, %v261
    %v390 = vpack.c.b16 %v266, %v262
    %v391 = vpack.c.b16 %v267, %v263
    %v392 = vpack.c.b16 %v272, %v268
    %v393 = vpack.c.b16 %v273, %v269
    %v394 = vpack.c.b16 %v274, %v270
    %v395 = vpack.c.b16 %v275, %v271
    %v396 = vpack.c.b16 %v280, %v276
    %v397 = vpack.c.b16 %v281, %v277
    %v398 = vpack.c.b16 %v282, %v278
    %v399 = vpack.c.b16 %v283, %v279
    %v400 = vpack.c.b16 %v288, %v284
    %v401 = vpack.c.b16 %v289, %v285
    %v402 = vpack.c.b16 %v290, %v286
    %v403 = vpack.c.b16 %v291, %v287
    %v404 = vpack.c.b16 %v296, %v292
    %v405 = vpack.c.b16 %v297, %v293
    %v406 = vpack.c.b16 %v298, %v294
    %v407 = vpack.c.b16 %v299, %v295
    %v408 = vpack.c.b16 %v304, %v300
    %v409 = vpack.c.b16 %v305, %v301
    %v410 = vpack.c.b16 %v306, %v302
    %v411 = vpack.c.b16 %v307, %v303
    %v412 = vpack.c.b16 %v312, %v308
    %v413 = vpack.c.b16 %v313, %v309
    %v414 = vpack.c.b16 %v314, %v310
    %v415 = vpack.c.b16 %v315, %v311
    %v416 = vpack.c.b16 %v320, %v316
    %v417 = vpack.c.b16 %v321, %v317
    %v418 = vpack.c.b16 %v322, %v318
    %v419 = vpack.c.b16 %v323, %v319
    %v420 = vpack.c.b16 %v328, %v324
    %v421 = vpack.c.b16 %v329, %v325
    %v422 = vpack.c.b16 %v330, %v326
    %v423 = vpack.c.b16 %v331, %v327
    %v424 = vpack.c.b16 %v336, %v332
    %v425 = vpack.c.b16 %v337, %v333
    %v426 = vpack.c.b16 %v338, %v334
    %v427 = vpack.c.b16 %v339, %v335
    %v428 = vpack.c.b16 %v344, %v340
    %v429 = vpack.c.b16 %v345, %v341
    %v430 = vpack.c.b16 %v346, %v342
    %v431 = vpack.c.b16 %v347, %v343
    %v432 = vpack.c.b16 %v352, %v348
    %v433 = vpack.c.b16 %v353, %v349
    %v434 = vpack.c.b16 %v354, %v350
    %v435 = vpack.c.b16 %v355, %v351
    %v436 = vpack.c.b16 %v360, %v356
    %v437 = vpack.c.b16 %v361, %v357
    %v438 = vpack.c.b16 %v362, %v358
    %v439 = vpack.c.b16 %v363, %v359
    %v440 = vpack.c.b16 %v368, %v364
    %v441 = vpack.c.b16 %v369, %v365
    %v442 = vpack.c.b16 %v370, %v366
    %v443 = vpack.c.b16 %v371, %v367
    %v444 = vpack.c.b16 %v376, %v372
    %v445 = vpack.c.b16 %v377, %v373
    %v446 = vpack.c.b16 %v378, %v374
    %v447 = vpack.c.b16 %v379, %v375
    %v448 = vpack.c.b16 %v384, %v380
    %v449 = vpack.c.b16 %v385, %v381
    %v450 = vpack.c.b16 %v386, %v382
    %v451 = vpack.c.b16 %v387, %v383
    %516 = vmatprep.subr.bf16.mxu0 %v389
    %517 = vmatpush1.bf16.msra.mxu0 %v388
    %518 = vmatprep.subr.bf16.mxu0 %v393
    %519 = vmatpush1.bf16.msra.mxu0 %v392
    %520 = vmatprep.subr.bf16.mxu0 %v397
    %521 = vmatpush1.bf16.msra.mxu0 %v396
    %522 = vmatprep.subr.bf16.mxu0 %v401
    %523 = vmatpush1.bf16.msra.mxu0 %v400
    %524 = vmatprep.subr.bf16.mxu0 %v405
    %525 = vmatpush1.bf16.msra.mxu0 %v404
    %526 = vmatprep.subr.bf16.mxu0 %v409
    %527 = vmatpush1.bf16.msra.mxu0 %v408
    %528 = vmatprep.subr.bf16.mxu0 %v413
    %529 = vmatpush1.bf16.msra.mxu0 %v412
    %530 = vmatprep.subr.bf16.mxu0 %v417
    %531 = vmatpush1.bf16.msra.mxu0 %v416
    %532 = vmatprep.subr.bf16.mxu0 %v421
    %533 = vmatpush1.bf16.msra.mxu0 %v420
    %534 = vmatprep.subr.bf16.mxu0 %v425
    %535 = vmatpush1.bf16.msra.mxu0 %v424
    %536 = vmatprep.subr.bf16.mxu0 %v429
    %537 = vmatpush1.bf16.msra.mxu0 %v428
    %538 = vmatprep.subr.bf16.mxu0 %v433
    %539 = vmatpush1.bf16.msra.mxu0 %v432
    %540 = vmatprep.subr.bf16.mxu0 %v437
    %541 = vmatpush1.bf16.msra.mxu0 %v436
    %542 = vmatprep.subr.bf16.mxu0 %v441
    %543 = vmatpush1.bf16.msra.mxu0 %v440
    %544 = vmatprep.subr.bf16.mxu0 %v445
    %545 = vmatpush1.bf16.msra.mxu0 %v444
    %546 = vmatprep.subr.bf16.mxu0 %v449
    %547 = vmatpush1.bf16.msra.mxu0 %v448
    %548 = vmatprep.mubr.bf16.mxu0 %v193
    %549 = vmatmul.mubr.bf16.gmra.mrb[0].mxu0 %v186
    %v550 = vpop.f32.mrb[0].mxu0
    %v551 = vadd.f32 %v154, %v550
    %v552 = vpop.f32.mrb[0].mxu0
    %v553 = vadd.f32 %v158, %v552
    %v554 = vpop.f32.mrb[0].mxu0
    %v555 = vpop.f32.mrb[0].mxu0
    %556 = vdwg.mxu0
    %557 = vmatprep.subr.bf16.mxu0 %v391
    %558 = vmatpush1.bf16.msra.mxu0 %v390
    %559 = vmatprep.subr.bf16.mxu0 %v395
    %560 = vmatpush1.bf16.msra.mxu0 %v394
    %561 = vmatprep.subr.bf16.mxu0 %v399
    %562 = vmatpush1.bf16.msra.mxu0 %v398
    %563 = vmatprep.subr.bf16.mxu0 %v403
    %564 = vmatpush1.bf16.msra.mxu0 %v402
    %565 = vmatprep.subr.bf16.mxu0 %v407
    %566 = vmatpush1.bf16.msra.mxu0 %v406
    %567 = vmatprep.subr.bf16.mxu0 %v411
    %568 = vmatpush1.bf16.msra.mxu0 %v410
    %569 = vmatprep.subr.bf16.mxu0 %v415
    %570 = vmatpush1.bf16.msra.mxu0 %v414
    %571 = vmatprep.subr.bf16.mxu0 %v419
    %572 = vmatpush1.bf16.msra.mxu0 %v418
    %573 = vmatprep.subr.bf16.mxu0 %v423
    %574 = vmatpush1.bf16.msra.mxu0 %v422
    %575 = vmatprep.subr.bf16.mxu0 %v427
    %576 = vmatpush1.bf16.msra.mxu0 %v426
    %577 = vmatprep.subr.bf16.mxu0 %v431
    %578 = vmatpush1.bf16.msra.mxu0 %v430
    %579 = vmatprep.subr.bf16.mxu0 %v435
    %580 = vmatpush1.bf16.msra.mxu0 %v434
    %581 = vmatprep.subr.bf16.mxu0 %v439
    %582 = vmatpush1.bf16.msra.mxu0 %v438
    %583 = vmatprep.subr.bf16.mxu0 %v443
    %584 = vmatpush1.bf16.msra.mxu0 %v442
    %585 = vmatprep.subr.bf16.mxu0 %v447
    %586 = vmatpush1.bf16.msra.mxu0 %v446
    %587 = vmatprep.subr.bf16.mxu0 %v451
    %588 = vmatpush1.bf16.msra.mxu0 %v450
    %589 = vmatprep.mubr.bf16.mxu0 %v193
    %590 = vmatmul.mubr.bf16.gmra.mrb[0].mxu0 %v186
    %v591 = vpop.f32.mrb[0].mxu0
    %v592 = vadd.f32 %v162, %v591
    %v593 = vpop.f32.mrb[0].mxu0
    %v594 = vadd.f32 %v166, %v593
    %v595 = vpop.f32.mrb[0].mxu0
    %v596 = vpop.f32.mrb[0].mxu0
    %597 = vdwg.mxu0
    %v598 = vmax.f32 %v551, 0.0
    %v599 = vmax.f32 %v553, 0.0
    %v600 = vmax.f32 %v592, 0.0
    %v601 = vmax.f32 %v594, 0.0
    %v602 = vpack.c.bf16 %v598, %v598
    %v603 = vpack.c.bf16 %v599, %v599
    %v604 = vpack.c.bf16 %v600, %v600
    %v605 = vpack.c.bf16 %v601, %v601
    %v606 = vld [vmem:[#allocation8] sm:$0xf]
    %v607 = vld [vmem:[#allocation8 + $0x4] sm:$0xf]
    %v608 = vld [vmem:[#allocation8 + $0x8] sm:$0xf]
    %v609 = vld [vmem:[#allocation8 + $0xc] sm:$0xf]
    %v610 = vld [vmem:[#allocation8 + $0x10] sm:$0xf]
    %v611 = vld [vmem:[#allocation8 + $0x14] sm:$0xf]
    %v612 = vld [vmem:[#allocation8 + $0x18] sm:$0xf]
    %v613 = vld [vmem:[#allocation8 + $0x1c] sm:$0xf]
    %v614 = vld [vmem:[#allocation8 + $0x20] sm:$0xf]
    %v615 = vld [vmem:[#allocation8 + $0x24] sm:$0xf]
    %v616 = vld [vmem:[#allocation8 + $0x28] sm:$0xf]
    %v617 = vld [vmem:[#allocation8 + $0x2c] sm:$0xf]
    %v618 = vld [vmem:[#allocation8 + $0x30] sm:$0xf]
    %v619 = vld [vmem:[#allocation8 + $0x34] sm:$0xf]
    %v620 = vld [vmem:[#allocation8 + $0x38] sm:$0xf]
    %v621 = vld [vmem:[#allocation8 + $0x3c] sm:$0xf]
    %v622 = vld [vmem:[#allocation8 + $0x40] sm:$0xf]
    %v623 = vld [vmem:[#allocation8 + $0x44] sm:$0xf]
    %v624 = vld [vmem:[#allocation8 + $0x48] sm:$0xf]
    %v625 = vld [vmem:[#allocation8 + $0x4c] sm:$0xf]
    %v626 = vld [vmem:[#allocation8 + $0x50] sm:$0xf]
    %v627 = vld [vmem:[#allocation8 + $0x54] sm:$0xf]
    %v628 = vld [vmem:[#allocation8 + $0x58] sm:$0xf]
    %v629 = vld [vmem:[#allocation8 + $0x5c] sm:$0xf]
    %v630 = vld [vmem:[#allocation8 + $0x60] sm:$0xf]
    %v631 = vld [vmem:[#allocation8 + $0x64] sm:$0xf]
    %v632 = vld [vmem:[#allocation8 + $0x68] sm:$0xf]
    %v633 = vld [vmem:[#allocation8 + $0x6c] sm:$0xf]
    %v634 = vld [vmem:[#allocation8 + $0x70] sm:$0xf]
    %v635 = vld [vmem:[#allocation8 + $0x74] sm:$0xf]
    %v636 = vld [vmem:[#allocation8 + $0x78] sm:$0xf]
    %v637 = vld [vmem:[#allocation8 + $0x7c] sm:$0xf]
    %v638 = vld [vmem:[#allocation8 + $0x80] sm:$0xf]
    %v639 = vld [vmem:[#allocation8 + $0x84] sm:$0xf]
    %v640 = vld [vmem:[#allocation8 + $0x88] sm:$0xf]
    %v641 = vld [vmem:[#allocation8 + $0x8c] sm:$0xf]
    %v642 = vld [vmem:[#allocation8 + $0x90] sm:$0xf]
    %v643 = vld [vmem:[#allocation8 + $0x94] sm:$0xf]
    %v644 = vld [vmem:[#allocation8 + $0x98] sm:$0xf]
    %v645 = vld [vmem:[#allocation8 + $0x9c] sm:$0xf]
    %v646 = vld [vmem:[#allocation8 + $0xa0] sm:$0xf]
    %v647 = vld [vmem:[#allocation8 + $0xa4] sm:$0xf]
    %v648 = vld [vmem:[#allocation8 + $0xa8] sm:$0xf]
    %v649 = vld [vmem:[#allocation8 + $0xac] sm:$0xf]
    %v650 = vld [vmem:[#allocation8 + $0xb0] sm:$0xf]
    %v651 = vld [vmem:[#allocation8 + $0xb4] sm:$0xf]
    %v652 = vld [vmem:[#allocation8 + $0xb8] sm:$0xf]
    %v653 = vld [vmem:[#allocation8 + $0xbc] sm:$0xf]
    %v654 = vld [vmem:[#allocation8 + $0xc0] sm:$0xf]
    %v655 = vld [vmem:[#allocation8 + $0xc4] sm:$0xf]
    %v656 = vld [vmem:[#allocation8 + $0xc8] sm:$0xf]
    %v657 = vld [vmem:[#allocation8 + $0xcc] sm:$0xf]
    %v658 = vld [vmem:[#allocation8 + $0xd0] sm:$0xf]
    %v659 = vld [vmem:[#allocation8 + $0xd4] sm:$0xf]
    %v660 = vld [vmem:[#allocation8 + $0xd8] sm:$0xf]
    %v661 = vld [vmem:[#allocation8 + $0xdc] sm:$0xf]
    %v662 = vld [vmem:[#allocation8 + $0xe0] sm:$0xf]
    %v663 = vld [vmem:[#allocation8 + $0xe4] sm:$0xf]
    %v664 = vld [vmem:[#allocation8 + $0xe8] sm:$0xf]
    %v665 = vld [vmem:[#allocation8 + $0xec] sm:$0xf]
    %v666 = vld [vmem:[#allocation8 + $0xf0] sm:$0xf]
    %v667 = vld [vmem:[#allocation8 + $0xf4] sm:$0xf]
    %v668 = vld [vmem:[#allocation8 + $0xf8] sm:$0xf]
    %v669 = vld [vmem:[#allocation8 + $0xfc] sm:$0xf]
    %v670 = vld [vmem:[#allocation10] sm:$0x1]
    %v672 = vlaneseq
    %v673 = vshrl.u32 %v672, 7
    %v674 = vsub.s32 0, %v673
    %v675 = vrot.slane %v670, %v674
    %v741 = vunpack.c.l.b16 %v606
    %v742 = vunpack.c.l.b16 %v607
    %v743 = vunpack.c.l.b16 %v608
    %v744 = vunpack.c.l.b16 %v609
    %v745 = vunpack.c.l.b16 %v610
    %v746 = vunpack.c.l.b16 %v611
    %v747 = vunpack.c.l.b16 %v612
    %v748 = vunpack.c.l.b16 %v613
    %v749 = vunpack.c.l.b16 %v614
    %v750 = vunpack.c.l.b16 %v615
    %v751 = vunpack.c.l.b16 %v616
    %v752 = vunpack.c.l.b16 %v617
    %v753 = vunpack.c.l.b16 %v618
    %v754 = vunpack.c.l.b16 %v619
    %v755 = vunpack.c.l.b16 %v620
    %v756 = vunpack.c.l.b16 %v621
    %v757 = vunpack.c.l.b16 %v622
    %v758 = vunpack.c.l.b16 %v623
    %v759 = vunpack.c.l.b16 %v624
    %v760 = vunpack.c.l.b16 %v625
    %v761 = vunpack.c.l.b16 %v626
    %v762 = vunpack.c.l.b16 %v627
    %v763 = vunpack.c.l.b16 %v628
    %v764 = vunpack.c.l.b16 %v629
    %v765 = vunpack.c.l.b16 %v630
    %v766 = vunpack.c.l.b16 %v631
    %v767 = vunpack.c.l.b16 %v632
    %v768 = vunpack.c.l.b16 %v633
    %v769 = vunpack.c.l.b16 %v634
    %v770 = vunpack.c.l.b16 %v635
    %v771 = vunpack.c.l.b16 %v636
    %v772 = vunpack.c.l.b16 %v637
    %v773 = vunpack.c.l.b16 %v638
    %v774 = vunpack.c.l.b16 %v639
    %v775 = vunpack.c.l.b16 %v640
    %v776 = vunpack.c.l.b16 %v641
    %v777 = vunpack.c.l.b16 %v642
    %v778 = vunpack.c.l.b16 %v643
    %v779 = vunpack.c.l.b16 %v644
    %v780 = vunpack.c.l.b16 %v645
    %v781 = vunpack.c.l.b16 %v646
    %v782 = vunpack.c.l.b16 %v647
    %v783 = vunpack.c.l.b16 %v648
    %v784 = vunpack.c.l.b16 %v649
    %v785 = vunpack.c.l.b16 %v650
    %v786 = vunpack.c.l.b16 %v651
    %v787 = vunpack.c.l.b16 %v652
    %v788 = vunpack.c.l.b16 %v653
    %v789 = vunpack.c.l.b16 %v654
    %v790 = vunpack.c.l.b16 %v655
    %v791 = vunpack.c.l.b16 %v656
    %v792 = vunpack.c.l.b16 %v657
    %v793 = vunpack.c.l.b16 %v658
    %v794 = vunpack.c.l.b16 %v659
    %v795 = vunpack.c.l.b16 %v660
    %v796 = vunpack.c.l.b16 %v661
    %v797 = vunpack.c.l.b16 %v662
    %v798 = vunpack.c.l.b16 %v663
    %v799 = vunpack.c.l.b16 %v664
    %v800 = vunpack.c.l.b16 %v665
    %v801 = vunpack.c.l.b16 %v666
    %v802 = vunpack.c.l.b16 %v667
    %v803 = vunpack.c.l.b16 %v668
    %v804 = vunpack.c.l.b16 %v669
    %v805 = vpack.c.b16 %v742, %v741
    %v806 = vpack.c.b16 %v744, %v743
    %v807 = vpack.c.b16 %v746, %v745
    %v808 = vpack.c.b16 %v748, %v747
    %v809 = vpack.c.b16 %v750, %v749
    %v810 = vpack.c.b16 %v752, %v751
    %v811 = vpack.c.b16 %v754, %v753
    %v812 = vpack.c.b16 %v756, %v755
    %v813 = vpack.c.b16 %v758, %v757
    %v814 = vpack.c.b16 %v760, %v759
    %v815 = vpack.c.b16 %v762, %v761
    %v816 = vpack.c.b16 %v764, %v763
    %v817 = vpack.c.b16 %v766, %v765
    %v818 = vpack.c.b16 %v768, %v767
    %v819 = vpack.c.b16 %v770, %v769
    %v820 = vpack.c.b16 %v772, %v771
    %v821 = vpack.c.b16 %v774, %v773
    %v822 = vpack.c.b16 %v776, %v775
    %v823 = vpack.c.b16 %v778, %v777
    %v824 = vpack.c.b16 %v780, %v779
    %v825 = vpack.c.b16 %v782, %v781
    %v826 = vpack.c.b16 %v784, %v783
    %v827 = vpack.c.b16 %v786, %v785
    %v828 = vpack.c.b16 %v788, %v787
    %v829 = vpack.c.b16 %v790, %v789
    %v830 = vpack.c.b16 %v792, %v791
    %v831 = vpack.c.b16 %v794, %v793
    %v832 = vpack.c.b16 %v796, %v795
    %v833 = vpack.c.b16 %v798, %v797
    %v834 = vpack.c.b16 %v800, %v799
    %v835 = vpack.c.b16 %v802, %v801
    %v836 = vpack.c.b16 %v804, %v803
    %869 = vmatprep.subr.bf16.mxu0 0
    %870 = vmatpush1.bf16.msra.mxu0 %v805
    %871 = vmatprep.subr.bf16.mxu0 0
    %872 = vmatpush1.bf16.msra.mxu0 %v806
    %873 = vmatprep.subr.bf16.mxu0 0
    %874 = vmatpush1.bf16.msra.mxu0 %v807
    %875 = vmatprep.subr.bf16.mxu0 0
    %876 = vmatpush1.bf16.msra.mxu0 %v808
    %877 = vmatprep.subr.bf16.mxu0 0
    %878 = vmatpush1.bf16.msra.mxu0 %v809
    %879 = vmatprep.subr.bf16.mxu0 0
    %880 = vmatpush1.bf16.msra.mxu0 %v810
    %881 = vmatprep.subr.bf16.mxu0 0
    %882 = vmatpush1.bf16.msra.mxu0 %v811
    %883 = vmatprep.subr.bf16.mxu0 0
    %884 = vmatpush1.bf16.msra.mxu0 %v812
    %885 = vmatprep.subr.bf16.mxu0 0
    %886 = vmatpush1.bf16.msra.mxu0 %v813
    %887 = vmatprep.subr.bf16.mxu0 0
    %888 = vmatpush1.bf16.msra.mxu0 %v814
    %889 = vmatprep.subr.bf16.mxu0 0
    %890 = vmatpush1.bf16.msra.mxu0 %v815
    %891 = vmatprep.subr.bf16.mxu0 0
    %892 = vmatpush1.bf16.msra.mxu0 %v816
    %893 = vmatprep.subr.bf16.mxu0 0
    %894 = vmatpush1.bf16.msra.mxu0 %v817
    %895 = vmatprep.subr.bf16.mxu0 0
    %896 = vmatpush1.bf16.msra.mxu0 %v818
    %897 = vmatprep.subr.bf16.mxu0 0
    %898 = vmatpush1.bf16.msra.mxu0 %v819
    %899 = vmatprep.subr.bf16.mxu0 0
    %900 = vmatpush1.bf16.msra.mxu0 %v820
    %901 = vmatprep.mubr.bf16.mxu0 %v603
    %902 = vmatmul.mubr.bf16.gmra.mrb[0].mxu0 %v602
    %v903 = vpop.f32.mrb[0].mxu0
    %v904 = vadd.f32 %v675, %v903
    %v905 = vpop.f32.mrb[0].mxu0
    %v906 = vpop.f32.mrb[0].mxu0
    %v907 = vpop.f32.mrb[0].mxu0
    %908 = vdwg.mxu0
    %909 = vmatprep.subr.bf16.mxu0 0
    %910 = vmatpush1.bf16.msra.mxu0 %v821
    %911 = vmatprep.subr.bf16.mxu0 0
    %912 = vmatpush1.bf16.msra.mxu0 %v822
    %913 = vmatprep.subr.bf16.mxu0 0
    %914 = vmatpush1.bf16.msra.mxu0 %v823
    %915 = vmatprep.subr.bf16.mxu0 0
    %916 = vmatpush1.bf16.msra.mxu0 %v824
    %917 = vmatprep.subr.bf16.mxu0 0
    %918 = vmatpush1.bf16.msra.mxu0 %v825
    %919 = vmatprep.subr.bf16.mxu0 0
    %920 = vmatpush1.bf16.msra.mxu0 %v826
    %921 = vmatprep.subr.bf16.mxu0 0
    %922 = vmatpush1.bf16.msra.mxu0 %v827
    %923 = vmatprep.subr.bf16.mxu0 0
    %924 = vmatpush1.bf16.msra.mxu0 %v828
    %925 = vmatprep.subr.bf16.mxu0 0
    %926 = vmatpush1.bf16.msra.mxu0 %v829
    %927 = vmatprep.subr.bf16.mxu0 0
    %928 = vmatpush1.bf16.msra.mxu0 %v830
    %929 = vmatprep.subr.bf16.mxu0 0
    %930 = vmatpush1.bf16.msra.mxu0 %v831
    %931 = vmatprep.subr.bf16.mxu0 0
    %932 = vmatpush1.bf16.msra.mxu0 %v832
    %933 = vmatprep.subr.bf16.mxu0 0
    %934 = vmatpush1.bf16.msra.mxu0 %v833
    %935 = vmatprep.subr.bf16.mxu0 0
    %936 = vmatpush1.bf16.msra.mxu0 %v834
    %937 = vmatprep.subr.bf16.mxu0 0
    %938 = vmatpush1.bf16.msra.mxu0 %v835
    %939 = vmatprep.subr.bf16.mxu0 0
    %940 = vmatpush1.bf16.msra.mxu0 %v836
    %941 = vmatprep.mubr.bf16.mxu0 %v605
    %942 = vmatmul.mubr.bf16.gmra.mrb[0].mxu0 %v604
    %v943 = vpop.f32.mrb[0].mxu0
    %v944 = vadd.f32 %v904, %v943
    %v945 = vpop.f32.mrb[0].mxu0
    %v946 = vpop.f32.mrb[0].mxu0
    %v947 = vpop.f32.mrb[0].mxu0
    %948 = vdwg.mxu0
    %949 = vst [vmem:[#allocation11] sm:$0x3] %v944
    // Predicated region
    $region42: #{dqn_forward.7} parent=1 // pred_check
      _
    $region43: #{dqn_forward.7} parent=1 // pred_check_branch
      %951 = sbr.rel (0) target = $region45
    $region44: #{dqn_forward.7} parent=1 // pred_region
      %s953 = ssub.s32 32, 32
      %954 = vsyncadd [#allocation4], %s953
      %s956 = sshll.u32 [#allocation11], 4
      %s957 = int_to_ptr.vmem [resolvable:$true] %s956
      %959 = dma.vmem_to_hbm [thread:$0]  %s957, 32, %s5, [#allocation4]
    $region45: #{dqn_forward.7} parent=1 // pred_fallthru
      _
    // Predicated region
    $region46: #{dqn_forward.7} parent=1 // pred_check
      _
    $region47: #{dqn_forward.7} parent=1 // pred_check_branch
      %961 = sbr.rel (0) target = $region49
    $region48: #{dqn_forward.7} parent=1 // pred_region
      %962 = dma.done [#allocation4], 32
    $region49: #{dqn_forward.7} parent=1 // pred_fallthru
      _
    %963 = vsyncpa [#allocation3], 1
    %964 = vsyncpa [#allocation6], 1
    %965 = vsyncpa [#allocation9], 1
    %966 = vsyncpa [#allocation4], 1

</llo_original>
